<compile_context>
chip_gen: v7x
topology: tpu7x:2x2x1
jax: 0.10.0
libtpu: 0.0.40
codegen_flags: <defaults>
</compile_context>

<pallas_src>
import functools
import math

import jax
import jax.numpy as jnp
from jax import lax
from jax.experimental import pallas as pl
from jax.experimental.pallas import tpu as pltpu


# --------------------------------------------------------------------------- helpers

def _row_tile(m: int) -> int:
    """Full-array block for small M; 256-row tiles (lane-dense, multi-MiB) otherwise."""
    return m if m <= 512 else 256


# --------------------------------------------------------------------------- fused QKV projection + multi-head attention

def _mha_heads(q, k, v, mask, heads, d, scale):
    """q: (Sq, E) f32, k/v: (Sk, E) f32, mask: None or (Sq, Sk). Returns (Sq, E) f32."""
    outs = []
    for h in range(heads):                       # static unroll over heads
        qh = q[:, h * d:(h + 1) * d]
        kh = k[:, h * d:(h + 1) * d]
        vh = v[:, h * d:(h + 1) * d]
        # contract on d without an explicit transpose of kh
        s = lax.dot_general(qh, kh, (((1,), (1,)), ((), ())),
                            preferred_element_type=jnp.float32) * scale
        if mask is not None:
            s = jnp.where(mask == 0, -1000000000.0, s)
        s = s - jnp.max(s, axis=-1, keepdims=True)
        p = jnp.exp(s)
        p = p / jnp.sum(p, axis=-1, keepdims=True)
        outs.append(jnp.dot(p, vh, preferred_element_type=jnp.float32))
    return jnp.concatenate(outs, axis=-1)


def _qkv_attn_kernel(q_ref, k_ref, v_ref,
                     wq_ref, bq_ref, wk_ref, bk_ref, wv_ref, bv_ref,
                     o_ref, *, heads: int, d: int, scale: float):
    q = jnp.dot(q_ref[0].astype(jnp.float32), wq_ref[...],
                preferred_element_type=jnp.float32) + bq_ref[...].astype(jnp.float32)
    k = jnp.dot(k_ref[0].astype(jnp.float32), wk_ref[...],
                preferred_element_type=jnp.float32) + bk_ref[...].astype(jnp.float32)
    v = jnp.dot(v_ref[0].astype(jnp.float32), wv_ref[...],
                preferred_element_type=jnp.float32) + bv_ref[...].astype(jnp.float32)
    o_ref[0] = _mha_heads(q, k, v, None, heads, d, scale).astype(o_ref.dtype)


def _qkv_attn_kernel_masked(q_ref, k_ref, v_ref,
                            wq_ref, bq_ref, wk_ref, bk_ref, wv_ref, bv_ref, m_ref,
                            o_ref, *, heads: int, d: int, scale: float):
    q = jnp.dot(q_ref[0].astype(jnp.float32), wq_ref[...],
                preferred_element_type=jnp.float32) + bq_ref[...].astype(jnp.float32)
    k = jnp.dot(k_ref[0].astype(jnp.float32), wk_ref[...],
                preferred_element_type=jnp.float32) + bk_ref[...].astype(jnp.float32)
    v = jnp.dot(v_ref[0].astype(jnp.float32), wv_ref[...],
                preferred_element_type=jnp.float32) + bv_ref[...].astype(jnp.float32)
    o_ref[0] = _mha_heads(q, k, v, m_ref[0], heads, d, scale).astype(o_ref.dtype)


def qkv_attention(query, key, value, mask, params):
    """Fused Q/K/V projection + scaled-dot-product multi-head attention.
    query: (B, Sq, E); key/value: (B, Sk, E); mask: None or (B, Sq, Sk)-broadcastable.
    Returns the attention context (B, Sq, E) (before the output projection)."""
    B, Sq, E = query.shape
    Sk = key.shape[1]
    H = params["heads"]
    d = E // H
    scale = 1.0 / math.sqrt(d)

    def rbias(b):
        return b.reshape(1, E).astype(query.dtype)

    in_specs = [
        pl.BlockSpec((1, Sq, E), lambda b: (b, 0, 0)),
        pl.BlockSpec((1, Sk, E), lambda b: (b, 0, 0)),
        pl.BlockSpec((1, Sk, E), lambda b: (b, 0, 0)),
        pl.BlockSpec((E, E), lambda b: (0, 0)),   # weights: constant index_map ->
        pl.BlockSpec((1, E), lambda b: (0, 0)),   # stay resident in VMEM across grid
        pl.BlockSpec((E, E), lambda b: (0, 0)),
        pl.BlockSpec((1, E), lambda b: (0, 0)),
        pl.BlockSpec((E, E), lambda b: (0, 0)),
        pl.BlockSpec((1, E), lambda b: (0, 0)),
    ]
    args = [query, key, value,
            params["WqT"], rbias(params["bq"]),
            params["WkT"], rbias(params["bk"]),
            params["WvT"], rbias(params["bv"])]

    if mask is None:
        kernel = functools.partial(_qkv_attn_kernel, heads=H, d=d, scale=scale)
    else:
        mask_b = jnp.broadcast_to(mask, (B, Sq, Sk)).astype(jnp.float32)
        in_specs.append(pl.BlockSpec((1, Sq, Sk), lambda b: (b, 0, 0)))
        args.append(mask_b)
        kernel = functools.partial(_qkv_attn_kernel_masked, heads=H, d=d, scale=scale)

    return pl.pallas_call(
        kernel,
        out_shape=jax.ShapeDtypeStruct((B, Sq, E), query.dtype),
        grid=(B,),
        in_specs=in_specs,
        out_specs=pl.BlockSpec((1, Sq, E), lambda b: (b, 0, 0)),
        compiler_params=pltpu.CompilerParams(dimension_semantics=("parallel",)),
    )(*args)


# --------------------------------------------------------------------------- linear (+ fused bias / ReLU)

def _linear_kernel(x_ref, w_ref, b_ref, o_ref, *, apply_relu: bool):
    acc = jnp.dot(x_ref[...], w_ref[...], preferred_element_type=jnp.float32)
    acc = acc + b_ref[...].astype(jnp.float32)
    if apply_relu:
        acc = jnp.maximum(acc, 0.0)
    o_ref[...] = acc.astype(o_ref.dtype)


def linear(x2d, w_t, b, *, apply_relu: bool = False):
    """y = x2d @ w_t + b.  x2d: (M, K); w_t: (K, N) (pre-transposed torch weight); b: (N,)."""
    M, K = x2d.shape
    N = w_t.shape[1]
    tm = _row_tile(M)
    return pl.pallas_call(
        functools.partial(_linear_kernel, apply_relu=apply_relu),
        out_shape=jax.ShapeDtypeStruct((M, N), x2d.dtype),
        grid=(pl.cdiv(M, tm),),
        in_specs=[
            pl.BlockSpec((tm, K), lambda i: (i, 0)),
            pl.BlockSpec((K, N), lambda i: (0, 0)),
            pl.BlockSpec((1, N), lambda i: (0, 0)),
        ],
        out_specs=pl.BlockSpec((tm, N), lambda i: (i, 0)),
        compiler_params=pltpu.CompilerParams(dimension_semantics=("parallel",)),
    )(x2d, w_t, b.reshape(1, N).astype(x2d.dtype))


# --------------------------------------------------------------------------- fused linear + residual-add + LayerNorm

def _linear_add_ln_kernel(x_ref, w_ref, b_ref, r_ref, g_ref, be_ref, o_ref, *, eps: float):
    y = jnp.dot(x_ref[...], w_ref[...], preferred_element_type=jnp.float32)
    y = y + b_ref[...].astype(jnp.float32) + r_ref[...].astype(jnp.float32)
    mu = jnp.mean(y, axis=-1, keepdims=True)
    yc = y - mu
    var = jnp.mean(yc * yc, axis=-1, keepdims=True)
    out = yc * lax.rsqrt(var + eps)
    out = out * g_ref[...].astype(jnp.float32) + be_ref[...].astype(jnp.float32)
    o_ref[...] = out.astype(o_ref.dtype)


def linear_add_layernorm(x2d, w_t, b, resid2d, gamma, beta, *, eps: float = 1e-5):
    """LayerNorm(x2d @ w_t + b + resid2d) over the last dim, with affine gamma/beta."""
    M, K = x2d.shape
    N = w_t.shape[1]
    tm = _row_tile(M)
    return pl.pallas_call(
        functools.partial(_linear_add_ln_kernel, eps=eps),
        out_shape=jax.ShapeDtypeStruct((M, N), x2d.dtype),
        grid=(pl.cdiv(M, tm),),
        in_specs=[
            pl.BlockSpec((tm, K), lambda i: (i, 0)),
            pl.BlockSpec((K, N), lambda i: (0, 0)),
            pl.BlockSpec((1, N), lambda i: (0, 0)),
            pl.BlockSpec((tm, N), lambda i: (i, 0)),
            pl.BlockSpec((1, N), lambda i: (0, 0)),
            pl.BlockSpec((1, N), lambda i: (0, 0)),
        ],
        out_specs=pl.BlockSpec((tm, N), lambda i: (i, 0)),
        compiler_params=pltpu.CompilerParams(dimension_semantics=("parallel",)),
    )(x2d, w_t, b.reshape(1, N).astype(jnp.float32),
      resid2d, gamma.reshape(1, N).astype(jnp.float32),
      beta.reshape(1, N).astype(jnp.float32))


# --------------------------------------------------------------------------- TransformerBlock forward

def transformer_block_forward(value, key, query, mask, params):
    """Matches TransformerBlock.forward(value, key, query, mask) in eval() mode (dropout = identity)."""
    B, Sq, E = query.shape
    q2 = query.reshape(B * Sq, E)

    # Fused QKV projection + multi-head attention (no HBM round-trip for Q/K/V).
    ctx = qkv_attention(query, key, value, mask, params)             # (B, Sq, E)

    # x = dropout(norm1(fc_out(ctx) + query))  -- dropout is identity in eval mode.
    x = linear_add_layernorm(ctx.reshape(B * Sq, E), params["WoT"], params["bo"],
                             q2, params["g1"], params["beta1"])

    # FeedForward: fc2(relu(fc1(x))), ReLU fused into fc1's kernel,
    # fc2 fused with the residual add and norm2.
    h = linear(x, params["W1T"], params["b1"], apply_relu=True)
    out = linear_add_layernorm(h, params["W2T"], params["b2"],
                               x, params["g2"], params["beta2"])
    return out.reshape(B, Sq, E)


# --------------------------------------------------------------------------- plain-JAX reference

def ref_transformer_block(value, key, query, mask, params):
    def lin(x, w_t, b):
        return x @ w_t + b

    B, Sq, E = query.shape
    Sk = key.shape[1]
    H = params["heads"]
    d = E // H

    q = lin(query, params["WqT"], params["bq"]).reshape(B, Sq, H, d).transpose(0, 2, 1, 3)
    k = lin(key, params["WkT"], params["bk"]).reshape(B, Sk, H, d).transpose(0, 2, 1, 3)
    v = lin(value, params["WvT"], params["bv"]).reshape(B, Sk, H, d).transpose(0, 2, 1, 3)

    scores = jnp.einsum("bhqd,bhkd->bhqk", q, k) / math.sqrt(d)
    if mask is not None:
        scores = jnp.where(mask[:, None, :, :] == 0, -1000000000.0, scores)
    w = jax.nn.softmax(scores, axis=-1)
    ctx = jnp.einsum("bhqk,bhkd->bhqd", w, v).transpose(0, 2, 1, 3).reshape(B, Sq, E)
    attn = lin(ctx, params["WoT"], params["bo"])

    def layernorm(t, g, be):
        mu = jnp.mean(t, axis=-1, keepdims=True)
        var = jnp.mean((t - mu) ** 2, axis=-1, keepdims=True)
        return (t - mu) / jnp.sqrt(var + 1e-5) * g + be

    x = layernorm(attn + query, params["g1"], params["beta1"])
    ffn = lin(jax.nn.relu(lin(x, params["W1T"], params["b1"])), params["W2T"], params["b2"])
    return layernorm(ffn + x, params["g2"], params["beta2"])


# --------------------------------------------------------------------------- demo / check

if __name__ == "__main__":
    B, S, E, H, EXP = 2, 8, 32, 4, 4
    HID = EXP * E

    root = jax.random.PRNGKey(0)
    ks = jax.random.split(root, 16)

    def init_lin(kw, kb, fan_in, fan_out):
        # torch nn.Linear-style init, weight stored pre-transposed to (in, out).
        lim = 1.0 / math.sqrt(fan_in)
        w_t = jax.random.uniform(kw, (fan_in, fan_out), jnp.float32, -lim, lim)
        b = jax.random.uniform(kb, (fan_out,), jnp.float32, -lim, lim)
        return w_t, b

    WqT, bq = init_lin(ks[0], ks[1], E, E)
    WkT, bk = init_lin(ks[2], ks[3], E, E)
    WvT, bv = init_lin(ks[4], ks[5], E, E)
    WoT, bo = init_lin(ks[6], ks[7], E, E)
    W1T, b1 = init_lin(ks[8], ks[9], E, HID)
    W2T, b2 = init_lin(ks[10], ks[11], HID, E)

    params = dict(
        heads=H,
        WqT=WqT, bq=bq, WkT=WkT, bk=bk, WvT=WvT, bv=bv, WoT=WoT, bo=bo,
        W1T=W1T, b1=b1, W2T=W2T, b2=b2,
        g1=jnp.ones((E,), jnp.float32), beta1=jnp.zeros((E,), jnp.float32),
        g2=jnp.ones((E,), jnp.float32), beta2=jnp.zeros((E,), jnp.float32),
    )

    value = jax.random.normal(ks[12], (B, S, E), jnp.float32)
    key_in = jax.random.normal(ks[13], (B, S, E), jnp.float32)
    query = jax.random.normal(ks[14], (B, S, E), jnp.float32)

    # Path 1: mask=None
    out0 = jax.block_until_ready(transformer_block_forward(value, key_in, query, None, params))
    ref0 = ref_transformer_block(value, key_in, query, None, params)
    assert out0.shape == (B, S, E)
    assert jnp.allclose(out0, ref0, atol=1e-3, rtol=1e-3), float(jnp.max(jnp.abs(out0 - ref0)))

    # Path 2: explicit mask (block the last key position for batch index 1)
    mask = jnp.ones((B, S, S), jnp.float32).at[1, :, -1].set(0.0)
    out1 = jax.block_until_ready(transformer_block_forward(value, key_in, query, mask, params))
    ref1 = ref_transformer_block(value, key_in, query, mask, params)
    assert jnp.allclose(out1, ref1, atol=1e-3, rtol=1e-3), float(jnp.max(jnp.abs(out1 - ref1)))

    print("KERNEL_OK")
</pallas_src>

<mosaic_0001>
module attributes {stable_mosaic.version = 11 : i64} {
  func.func @_qkv_attn_kernel(%arg0: i32, %arg1: memref<1x8x32xf32, #tpu.memory_space<vmem>>, %arg2: memref<1x8x32xf32, #tpu.memory_space<vmem>>, %arg3: memref<1x8x32xf32, #tpu.memory_space<vmem>>, %arg4: memref<32x32xf32, #tpu.memory_space<vmem>>, %arg5: memref<1x32xf32, #tpu.memory_space<vmem>>, %arg6: memref<32x32xf32, #tpu.memory_space<vmem>>, %arg7: memref<1x32xf32, #tpu.memory_space<vmem>>, %arg8: memref<32x32xf32, #tpu.memory_space<vmem>>, %arg9: memref<1x32xf32, #tpu.memory_space<vmem>>, %arg10: memref<1x8x32xf32, #tpu.memory_space<vmem>>) attributes {dimension_semantics = [#tpu.dimension_semantics<parallel>], iteration_bounds = array<i64: 2>, scalar_prefetch = 0 : i64, scratch_operands = 0 : i64, tpu.core_type = #tpu.core_type<tc>, window_params = [{transform_indices = @transform_0, window_bounds = array<i64: 1, 8, 32>}, {transform_indices = @transform_1, window_bounds = array<i64: 1, 8, 32>}, {transform_indices = @transform_2, window_bounds = array<i64: 1, 8, 32>}, {pipeline_mode = #tpu.pipeline_mode<synchronous>, transform_indices = @transform_3, window_bounds = array<i64: 32, 32>}, {pipeline_mode = #tpu.pipeline_mode<synchronous>, transform_indices = @transform_4, window_bounds = array<i64: 1, 32>}, {pipeline_mode = #tpu.pipeline_mode<synchronous>, transform_indices = @transform_5, window_bounds = array<i64: 32, 32>}, {pipeline_mode = #tpu.pipeline_mode<synchronous>, transform_indices = @transform_6, window_bounds = array<i64: 1, 32>}, {pipeline_mode = #tpu.pipeline_mode<synchronous>, transform_indices = @transform_7, window_bounds = array<i64: 32, 32>}, {pipeline_mode = #tpu.pipeline_mode<synchronous>, transform_indices = @transform_8, window_bounds = array<i64: 1, 32>}, {transform_indices = @transform_9, window_bounds = array<i64: 1, 8, 32>}]} {
    %c0 = arith.constant 0 : index
    %c0_0 = arith.constant 0 : index
    %c0_1 = arith.constant 0 : index
    %0 = vector.load %arg1[%c0, %c0_0, %c0_1] : memref<1x8x32xf32, #tpu.memory_space<vmem>>, vector<1x8x32xf32>
    %1 = vector.shape_cast %0 : vector<1x8x32xf32> to vector<8x32xf32>
    %c0_2 = arith.constant 0 : index
    %c0_3 = arith.constant 0 : index
    %2 = vector.load %arg4[%c0_2, %c0_3] : memref<32x32xf32, #tpu.memory_space<vmem>>, vector<32x32xf32>
    %cst = arith.constant dense<0.000000e+00> : vector<8x32xf32>
    %3 = tpu.matmul %1, %2, %cst {dimension_numbers = #tpu.dot_dimension_numbers<[1], [0], [0], [1], [0, 0, 1, 1], [], []>} : vector<8x32xf32>, vector<32x32xf32>, vector<8x32xf32> -> vector<8x32xf32>
    %c0_4 = arith.constant 0 : index
    %c0_5 = arith.constant 0 : index
    %4 = vector.load %arg5[%c0_4, %c0_5] : memref<1x32xf32, #tpu.memory_space<vmem>>, vector<1x32xf32>
    %5 = vector.broadcast %4 : vector<1x32xf32> to vector<8x32xf32>
    %6 = arith.addf %3, %5 : vector<8x32xf32>
    %c0_6 = arith.constant 0 : index
    %c0_7 = arith.constant 0 : index
    %c0_8 = arith.constant 0 : index
    %7 = vector.load %arg2[%c0_6, %c0_7, %c0_8] : memref<1x8x32xf32, #tpu.memory_space<vmem>>, vector<1x8x32xf32>
    %8 = vector.shape_cast %7 : vector<1x8x32xf32> to vector<8x32xf32>
    %c0_9 = arith.constant 0 : index
    %c0_10 = arith.constant 0 : index
    %9 = vector.load %arg6[%c0_9, %c0_10] : memref<32x32xf32, #tpu.memory_space<vmem>>, vector<32x32xf32>
    %cst_11 = arith.constant dense<0.000000e+00> : vector<8x32xf32>
    %10 = tpu.matmul %8, %9, %cst_11 {dimension_numbers = #tpu.dot_dimension_numbers<[1], [0], [0], [1], [0, 0, 1, 1], [], []>} : vector<8x32xf32>, vector<32x32xf32>, vector<8x32xf32> -> vector<8x32xf32>
    %c0_12 = arith.constant 0 : index
    %c0_13 = arith.constant 0 : index
    %11 = vector.load %arg7[%c0_12, %c0_13] : memref<1x32xf32, #tpu.memory_space<vmem>>, vector<1x32xf32>
    %12 = vector.broadcast %11 : vector<1x32xf32> to vector<8x32xf32>
    %13 = arith.addf %10, %12 : vector<8x32xf32>
    %c0_14 = arith.constant 0 : index
    %c0_15 = arith.constant 0 : index
    %c0_16 = arith.constant 0 : index
    %14 = vector.load %arg3[%c0_14, %c0_15, %c0_16] : memref<1x8x32xf32, #tpu.memory_space<vmem>>, vector<1x8x32xf32>
    %15 = vector.shape_cast %14 : vector<1x8x32xf32> to vector<8x32xf32>
    %c0_17 = arith.constant 0 : index
    %c0_18 = arith.constant 0 : index
    %16 = vector.load %arg8[%c0_17, %c0_18] : memref<32x32xf32, #tpu.memory_space<vmem>>, vector<32x32xf32>
    %cst_19 = arith.constant dense<0.000000e+00> : vector<8x32xf32>
    %17 = tpu.matmul %15, %16, %cst_19 {dimension_numbers = #tpu.dot_dimension_numbers<[1], [0], [0], [1], [0, 0, 1, 1], [], []>} : vector<8x32xf32>, vector<32x32xf32>, vector<8x32xf32> -> vector<8x32xf32>
    %c0_20 = arith.constant 0 : index
    %c0_21 = arith.constant 0 : index
    %18 = vector.load %arg9[%c0_20, %c0_21] : memref<1x32xf32, #tpu.memory_space<vmem>>, vector<1x32xf32>
    %19 = vector.broadcast %18 : vector<1x32xf32> to vector<8x32xf32>
    %20 = arith.addf %17, %19 : vector<8x32xf32>
    %21 = vector.extract_strided_slice %6 {offsets = [0, 0], sizes = [8, 8], strides = [1, 1]} : vector<8x32xf32> to vector<8x8xf32>
    %22 = vector.extract_strided_slice %13 {offsets = [0, 0], sizes = [8, 8], strides = [1, 1]} : vector<8x32xf32> to vector<8x8xf32>
    %23 = vector.extract_strided_slice %20 {offsets = [0, 0], sizes = [8, 8], strides = [1, 1]} : vector<8x32xf32> to vector<8x8xf32>
    %cst_22 = arith.constant dense<0.000000e+00> : vector<8x8xf32>
    %24 = tpu.matmul %21, %22, %cst_22 {dimension_numbers = #tpu.dot_dimension_numbers<[1], [1], [0], [0], [0, 0, 1, 0], [], []>} : vector<8x8xf32>, vector<8x8xf32>, vector<8x8xf32> -> vector<8x8xf32>
    %cst_23 = arith.constant 0.353553385 : f32
    %25 = vector.broadcast %cst_23 : f32 to vector<8x8xf32>
    %26 = arith.mulf %24, %25 : vector<8x8xf32>
    %cst_24 = arith.constant dense<0xFF800000> : vector<8xf32>
    %27 = vector.multi_reduction <maximumf>, %26, %cst_24 [1] : vector<8x8xf32> to vector<8xf32>
    %28 = vector.shape_cast %27 : vector<8xf32> to vector<8x1xf32>
    %29 = vector.broadcast %28 : vector<8x1xf32> to vector<8x8xf32>
    %30 = arith.subf %26, %29 : vector<8x8xf32>
    %31 = math.exp %30 : vector<8x8xf32>
    %cst_25 = arith.constant dense<0.000000e+00> : vector<8xf32>
    %32 = vector.multi_reduction <add>, %31, %cst_25 [1] : vector<8x8xf32> to vector<8xf32>
    %33 = vector.shape_cast %32 : vector<8xf32> to vector<8x1xf32>
    %34 = vector.broadcast %33 : vector<8x1xf32> to vector<8x8xf32>
    %35 = arith.divf %31, %34 : vector<8x8xf32>
    %cst_26 = arith.constant dense<0.000000e+00> : vector<8x8xf32>
    %36 = tpu.matmul %35, %23, %cst_26 {dimension_numbers = #tpu.dot_dimension_numbers<[1], [0], [0], [1], [0, 0, 1, 1], [], []>} : vector<8x8xf32>, vector<8x8xf32>, vector<8x8xf32> -> vector<8x8xf32>
    %37 = vector.extract_strided_slice %6 {offsets = [0, 8], sizes = [8, 8], strides = [1, 1]} : vector<8x32xf32> to vector<8x8xf32>
    %38 = vector.extract_strided_slice %13 {offsets = [0, 8], sizes = [8, 8], strides = [1, 1]} : vector<8x32xf32> to vector<8x8xf32>
    %39 = vector.extract_strided_slice %20 {offsets = [0, 8], sizes = [8, 8], strides = [1, 1]} : vector<8x32xf32> to vector<8x8xf32>
    %cst_27 = arith.constant dense<0.000000e+00> : vector<8x8xf32>
    %40 = tpu.matmul %37, %38, %cst_27 {dimension_numbers = #tpu.dot_dimension_numbers<[1], [1], [0], [0], [0, 0, 1, 0], [], []>} : vector<8x8xf32>, vector<8x8xf32>, vector<8x8xf32> -> vector<8x8xf32>
    %cst_28 = arith.constant 0.353553385 : f32
    %41 = vector.broadcast %cst_28 : f32 to vector<8x8xf32>
    %42 = arith.mulf %40, %41 : vector<8x8xf32>
    %cst_29 = arith.constant dense<0xFF800000> : vector<8xf32>
    %43 = vector.multi_reduction <maximumf>, %42, %cst_29 [1] : vector<8x8xf32> to vector<8xf32>
    %44 = vector.shape_cast %43 : vector<8xf32> to vector<8x1xf32>
    %45 = vector.broadcast %44 : vector<8x1xf32> to vector<8x8xf32>
    %46 = arith.subf %42, %45 : vector<8x8xf32>
    %47 = math.exp %46 : vector<8x8xf32>
    %cst_30 = arith.constant dense<0.000000e+00> : vector<8xf32>
    %48 = vector.multi_reduction <add>, %47, %cst_30 [1] : vector<8x8xf32> to vector<8xf32>
    %49 = vector.shape_cast %48 : vector<8xf32> to vector<8x1xf32>
    %50 = vector.broadcast %49 : vector<8x1xf32> to vector<8x8xf32>
    %51 = arith.divf %47, %50 : vector<8x8xf32>
    %cst_31 = arith.constant dense<0.000000e+00> : vector<8x8xf32>
    %52 = tpu.matmul %51, %39, %cst_31 {dimension_numbers = #tpu.dot_dimension_numbers<[1], [0], [0], [1], [0, 0, 1, 1], [], []>} : vector<8x8xf32>, vector<8x8xf32>, vector<8x8xf32> -> vector<8x8xf32>
    %53 = vector.extract_strided_slice %6 {offsets = [0, 16], sizes = [8, 8], strides = [1, 1]} : vector<8x32xf32> to vector<8x8xf32>
    %54 = vector.extract_strided_slice %13 {offsets = [0, 16], sizes = [8, 8], strides = [1, 1]} : vector<8x32xf32> to vector<8x8xf32>
    %55 = vector.extract_strided_slice %20 {offsets = [0, 16], sizes = [8, 8], strides = [1, 1]} : vector<8x32xf32> to vector<8x8xf32>
    %cst_32 = arith.constant dense<0.000000e+00> : vector<8x8xf32>
    %56 = tpu.matmul %53, %54, %cst_32 {dimension_numbers = #tpu.dot_dimension_numbers<[1], [1], [0], [0], [0, 0, 1, 0], [], []>} : vector<8x8xf32>, vector<8x8xf32>, vector<8x8xf32> -> vector<8x8xf32>
    %cst_33 = arith.constant 0.353553385 : f32
    %57 = vector.broadcast %cst_33 : f32 to vector<8x8xf32>
    %58 = arith.mulf %56, %57 : vector<8x8xf32>
    %cst_34 = arith.constant dense<0xFF800000> : vector<8xf32>
    %59 = vector.multi_reduction <maximumf>, %58, %cst_34 [1] : vector<8x8xf32> to vector<8xf32>
    %60 = vector.shape_cast %59 : vector<8xf32> to vector<8x1xf32>
    %61 = vector.broadcast %60 : vector<8x1xf32> to vector<8x8xf32>
    %62 = arith.subf %58, %61 : vector<8x8xf32>
    %63 = math.exp %62 : vector<8x8xf32>
    %cst_35 = arith.constant dense<0.000000e+00> : vector<8xf32>
    %64 = vector.multi_reduction <add>, %63, %cst_35 [1] : vector<8x8xf32> to vector<8xf32>
    %65 = vector.shape_cast %64 : vector<8xf32> to vector<8x1xf32>
    %66 = vector.broadcast %65 : vector<8x1xf32> to vector<8x8xf32>
    %67 = arith.divf %63, %66 : vector<8x8xf32>
    %cst_36 = arith.constant dense<0.000000e+00> : vector<8x8xf32>
    %68 = tpu.matmul %67, %55, %cst_36 {dimension_numbers = #tpu.dot_dimension_numbers<[1], [0], [0], [1], [0, 0, 1, 1], [], []>} : vector<8x8xf32>, vector<8x8xf32>, vector<8x8xf32> -> vector<8x8xf32>
    %69 = vector.extract_strided_slice %6 {offsets = [0, 24], sizes = [8, 8], strides = [1, 1]} : vector<8x32xf32> to vector<8x8xf32>
    %70 = vector.extract_strided_slice %13 {offsets = [0, 24], sizes = [8, 8], strides = [1, 1]} : vector<8x32xf32> to vector<8x8xf32>
    %71 = vector.extract_strided_slice %20 {offsets = [0, 24], sizes = [8, 8], strides = [1, 1]} : vector<8x32xf32> to vector<8x8xf32>
    %cst_37 = arith.constant dense<0.000000e+00> : vector<8x8xf32>
    %72 = tpu.matmul %69, %70, %cst_37 {dimension_numbers = #tpu.dot_dimension_numbers<[1], [1], [0], [0], [0, 0, 1, 0], [], []>} : vector<8x8xf32>, vector<8x8xf32>, vector<8x8xf32> -> vector<8x8xf32>
    %cst_38 = arith.constant 0.353553385 : f32
    %73 = vector.broadcast %cst_38 : f32 to vector<8x8xf32>
    %74 = arith.mulf %72, %73 : vector<8x8xf32>
    %cst_39 = arith.constant dense<0xFF800000> : vector<8xf32>
    %75 = vector.multi_reduction <maximumf>, %74, %cst_39 [1] : vector<8x8xf32> to vector<8xf32>
    %76 = vector.shape_cast %75 : vector<8xf32> to vector<8x1xf32>
    %77 = vector.broadcast %76 : vector<8x1xf32> to vector<8x8xf32>
    %78 = arith.subf %74, %77 : vector<8x8xf32>
    %79 = math.exp %78 : vector<8x8xf32>
    %cst_40 = arith.constant dense<0.000000e+00> : vector<8xf32>
    %80 = vector.multi_reduction <add>, %79, %cst_40 [1] : vector<8x8xf32> to vector<8xf32>
    %81 = vector.shape_cast %80 : vector<8xf32> to vector<8x1xf32>
    %82 = vector.broadcast %81 : vector<8x1xf32> to vector<8x8xf32>
    %83 = arith.divf %79, %82 : vector<8x8xf32>
    %cst_41 = arith.constant dense<0.000000e+00> : vector<8x8xf32>
    %84 = tpu.matmul %83, %71, %cst_41 {dimension_numbers = #tpu.dot_dimension_numbers<[1], [0], [0], [1], [0, 0, 1, 1], [], []>} : vector<8x8xf32>, vector<8x8xf32>, vector<8x8xf32> -> vector<8x8xf32>
    %85 = tpu.concatenate %36, %52, %68, %84 in 1 : vector<8x8xf32>, vector<8x8xf32>, vector<8x8xf32>, vector<8x8xf32> -> vector<8x32xf32>
    %c0_42 = arith.constant 0 : index
    %c0_43 = arith.constant 0 : index
    %c0_44 = arith.constant 0 : index
    %86 = vector.load %arg10[%c0_42, %c0_43, %c0_44] : memref<1x8x32xf32, #tpu.memory_space<vmem>>, vector<1x8x32xf32>
    %87 = vector.shape_cast %86 : vector<1x8x32xf32> to vector<8x32xf32>
    %88 = vector.shape_cast %85 : vector<8x32xf32> to vector<1x8x32xf32>
    tpu.vector_store %arg10[%c0_42, %c0_43, %c0_44], %88 {strides = array<i32>} : memref<1x8x32xf32, #tpu.memory_space<vmem>>, vector<1x8x32xf32>,
    return
  }
  func.func @transform_0(%arg0: i32) -> (i32, i32, i32) {
    %c0_i32 = arith.constant 0 : i32
    %c0_i32_0 = arith.constant 0 : i32
    %c0_i32_1 = arith.constant 0 : i32
    return %arg0, %c0_i32, %c0_i32_0 : i32, i32, i32
  }
  func.func @transform_1(%arg0: i32) -> (i32, i32, i32) {
    %c0_i32 = arith.constant 0 : i32
    %c0_i32_0 = arith.constant 0 : i32
    %c0_i32_1 = arith.constant 0 : i32
    return %arg0, %c0_i32, %c0_i32_0 : i32, i32, i32
  }
  func.func @transform_2(%arg0: i32) -> (i32, i32, i32) {
    %c0_i32 = arith.constant 0 : i32
    %c0_i32_0 = arith.constant 0 : i32
    %c0_i32_1 = arith.constant 0 : i32
    return %arg0, %c0_i32, %c0_i32_0 : i32, i32, i32
  }
  func.func @transform_3(%arg0: i32) -> (i32, i32) {
    %c0_i32 = arith.constant 0 : i32
    %c0_i32_0 = arith.constant 0 : i32
    %c0_i32_1 = arith.constant 0 : i32
    return %c0_i32, %c0_i32_0 : i32, i32
  }
  func.func @transform_4(%arg0: i32) -> (i32, i32) {
    %c0_i32 = arith.constant 0 : i32
    %c0_i32_0 = arith.constant 0 : i32
    %c0_i32_1 = arith.constant 0 : i32
    return %c0_i32, %c0_i32_0 : i32, i32
  }
  func.func @transform_5(%arg0: i32) -> (i32, i32) {
    %c0_i32 = arith.constant 0 : i32
    %c0_i32_0 = arith.constant 0 : i32
    %c0_i32_1 = arith.constant 0 : i32
    return %c0_i32, %c0_i32_0 : i32, i32
  }
  func.func @transform_6(%arg0: i32) -> (i32, i32) {
    %c0_i32 = arith.constant 0 : i32
    %c0_i32_0 = arith.constant 0 : i32
    %c0_i32_1 = arith.constant 0 : i32
    return %c0_i32, %c0_i32_0 : i32, i32
  }
  func.func @transform_7(%arg0: i32) -> (i32, i32) {
    %c0_i32 = arith.constant 0 : i32
    %c0_i32_0 = arith.constant 0 : i32
    %c0_i32_1 = arith.constant 0 : i32
    return %c0_i32, %c0_i32_0 : i32, i32
  }
  func.func @transform_8(%arg0: i32) -> (i32, i32) {
    %c0_i32 = arith.constant 0 : i32
    %c0_i32_0 = arith.constant 0 : i32
    %c0_i32_1 = arith.constant 0 : i32
    return %c0_i32, %c0_i32_0 : i32, i32
  }
  func.func @transform_9(%arg0: i32) -> (i32, i32, i32) {
    %c0_i32 = arith.constant 0 : i32
    %c0_i32_0 = arith.constant 0 : i32
    %c0_i32_1 = arith.constant 0 : i32
    return %arg0, %c0_i32, %c0_i32_0 : i32, i32, i32
  }
}

</mosaic_0001>

<llo_original>
// kernel: tpu_custom_call.1
$region0: #{tpu_custom_call.1}
  #allocation0 [shape = 'u32[]', space=smem, size = 0x4, offset = 0x4, fixed_abs, tag = 'smem constant byte address 0x4 - core index']
  #allocation1 [shape = 'u32[144,128]{1,0:T(1,128)}', space=vmem, size = 0x12000, scoped, tag = 'internal scratch']
  %s0 = inlined_call_operand.hbm [shape: f32[2,8,32], index: 0, kind: input, shape index: {}]
  %s1 = inlined_call_operand.hbm [shape: f32[2,8,32], index: 1, kind: input, shape index: {}]
  %s2 = inlined_call_operand.hbm [shape: f32[2,8,32], index: 2, kind: input, shape index: {}]
  %s3 = inlined_call_operand.hbm [shape: f32[32,32], index: 3, kind: input, shape index: {}]
  %s4 = inlined_call_operand.vmem [shape: f32[1,32], index: 4, kind: input, shape index: {}]
  %s5 = inlined_call_operand.hbm [shape: f32[32,32], index: 5, kind: input, shape index: {}]
  %s6 = inlined_call_operand.vmem [shape: f32[1,32], index: 6, kind: input, shape index: {}]
  %s7 = inlined_call_operand.hbm [shape: f32[32,32], index: 7, kind: input, shape index: {}]
  %s8 = inlined_call_operand.vmem [shape: f32[1,32], index: 8, kind: input, shape index: {}]
  %s9 = inlined_call_operand.hbm [shape: f32[2,8,32], index: 9, kind: output, shape index: {}]
  %s10 = sld [smem:[#allocation0]]
  $region93: #{tpu_custom_call.1} parent=0
    _
  %s12 = ssub.s32 1, %s10
  %s13 = scalar_select 0, %s12, %s10
  $region1: #{tpu_custom_call.1} parent=0
    #allocation2 [shape = 'u8[8192]{0}', space=vmem, size = 0x2000, scoped, tag = 'input window, operand 0']
    #allocation3 [shape = 's32[2]{0}', space=sflag, size = 0x8, scoped, tag = 'scoped memory for tpu_custom_call.1']
    #allocation4 [shape = 's32[2]{0}', space=sflag, size = 0x8, scoped, tag = 'scoped memory for tpu_custom_call.1']
    #allocation5 [shape = 'u8[8192]{0}', space=vmem, size = 0x2000, scoped, tag = 'input window, operand 1']
    #allocation6 [shape = 's32[2]{0}', space=sflag, size = 0x8, scoped, tag = 'scoped memory for tpu_custom_call.1']
    #allocation7 [shape = 'u8[8192]{0}', space=vmem, size = 0x2000, scoped, tag = 'input window, operand 2']
    #allocation8 [shape = 'u8[16384]{0}', space=vmem, size = 0x4000, scoped, tag = 'input window, operand 3, single buffered']
    #allocation9 [shape = 's32[1]{0}', space=sflag, size = 0x4, scoped, tag = 'scoped memory for tpu_custom_call.1']
    #allocation10 [shape = 'u8[16384]{0}', space=vmem, size = 0x4000, scoped, tag = 'input window, operand 5, single buffered']
    #allocation11 [shape = 'u8[16384]{0}', space=vmem, size = 0x4000, scoped, tag = 'input window, operand 7, single buffered']
    #allocation12 [shape = 's32[1]{0}', space=sflag, size = 0x4, scoped, tag = 'scoped memory for tpu_custom_call.1']
    #allocation13 [shape = 'u8[8192]{0}', space=vmem, size = 0x2000, scoped, tag = 'output window, operand 0']
    %14 = vsyncpa [#allocation3], 0
    %s15 = scalar_lea.sflag [#allocation3], 1
    %16 = vsyncpa %s15, 0
    %17 = vsyncpa [#allocation6], 0
    %s18 = scalar_lea.sflag [#allocation6], 1
    %19 = vsyncpa %s18, 0
    %20 = vsyncpa [#allocation9], 0
    %21 = vsyncpa [#allocation12], 0
    %22 = vsyncpa [#allocation4], 0
    %s23 = scalar_lea.sflag [#allocation4], 1
    %24 = vsyncpa %s23, 0
    loop: start=0, step=1, limit=4
    $region2: #{tpu_custom_call.1} parent=1 // loop_pre_header
      _
    $region3: #{tpu_custom_call.1} parent=1 // loop_header
      %s26 = sphi 0, %s30
      %p27 = scmp.ge.s32.totalorder %s26, 4
      %s36 = sphi 0, %s38
      %s39 = sphi 0, %s36
      %s40 = sphi 0, %s39
      %s56 = sphi 0, %s40
      %s62 = sphi 0, %s64
      %s65 = sphi 0, %s62
      %s66 = sphi 0, %s65
      %s82 = sphi 0, %s66
      %s88 = sphi 0, %s90
      %s91 = sphi 0, %s88
      %s92 = sphi 0, %s91
      %s108 = sphi 0, %s92
      %s112 = sphi 0, %s112
      %s114 = sphi 0, %s112
      %s115 = sphi 0, %s114
      %s129 = sphi 0, %s115
      %s133 = sphi 0, %s133
      %s135 = sphi 0, %s133
      %s136 = sphi 0, %s135
      %s150 = sphi 0, %s136
      %s154 = sphi 0, %s154
      %s156 = sphi 0, %s154
      %s157 = sphi 0, %s156
      %s171 = sphi 0, %s157
      %s175 = sphi 0, %s175
      %s177 = sphi 0, %s175
      %s178 = sphi 0, %s177
      %s192 = sphi 0, %s178
      %s196 = sphi 0, %s196
      %s198 = sphi 0, %s196
      %s199 = sphi 0, %s198
      %s213 = sphi 0, %s199
      %s217 = sphi 0, %s217
      %s219 = sphi 0, %s217
      %s220 = sphi 0, %s219
      %s234 = sphi 0, %s220
      %s240 = sphi 0, %s242
      %s243 = sphi 0, %s240
      %s244 = sphi 0, %s243
      %s260 = sphi 0, %s244
    $region4: #{tpu_custom_call.1} parent=1 // loop_header_branch
      %29 = sbr.rel (%p27) target = $region8
    $region5: #{tpu_custom_call.1} parent=1 // loop_body
      %s31 = ssub.s32 %s26, 1
      %s32 = ssub.s32 %s26, 2
      %s33 = sadd.s32 %s26, 1
      %s34 = ssub.s32 %s26, %s33
      %p35 = scmp.eq.s32.totalorder %s34, 0
      %s37 = sadd.s32 %s36, 1
      %s38 = scalar_select %p35, %s36, %s37
      %p41 = pneg %p35
      %p42 = scmp.eq.s32.totalorder %s26, 1
      %p43 = por %p41, %p42
      %p44 = scmp.ne.s32.totalorder %s36, %s39
      %p45 = scmp.eq.s32.totalorder %s26, 0
      %p46 = por %p44, %p45
      %p47 = scmp.ne.s32.totalorder %s36, %s39
      %p48 = scmp.eq.s32.totalorder %s31, 1
      %p49 = por %p47, %p48
      %p50 = scmp.ne.s32.totalorder %s39, %s40
      %p51 = scmp.eq.s32.totalorder %s31, 0
      %p52 = por %p50, %p51
      %p53 = scmp.ne.s32.totalorder %s39, %s40
      %p54 = scmp.eq.s32.totalorder %s32, 1
      %p55 = por %p53, %p54
      %p57 = scmp.ne.s32.totalorder %s40, %s56
      %p58 = scmp.eq.s32.totalorder %s32, 0
      %p59 = por %p57, %p58
      %s60 = ssub.s32 %s26, %s33
      %p61 = scmp.eq.s32.totalorder %s60, 0
      %s63 = sadd.s32 %s62, 1
      %s64 = scalar_select %p61, %s62, %s63
      %p67 = pneg %p61
      %p68 = scmp.eq.s32.totalorder %s26, 1
      %p69 = por %p67, %p68
      %p70 = scmp.ne.s32.totalorder %s62, %s65
      %p71 = scmp.eq.s32.totalorder %s26, 0
      %p72 = por %p70, %p71
      %p73 = scmp.ne.s32.totalorder %s62, %s65
      %p74 = scmp.eq.s32.totalorder %s31, 1
      %p75 = por %p73, %p74
      %p76 = scmp.ne.s32.totalorder %s65, %s66
      %p77 = scmp.eq.s32.totalorder %s31, 0
      %p78 = por %p76, %p77
      %p79 = scmp.ne.s32.totalorder %s65, %s66
      %p80 = scmp.eq.s32.totalorder %s32, 1
      %p81 = por %p79, %p80
      %p83 = scmp.ne.s32.totalorder %s66, %s82
      %p84 = scmp.eq.s32.totalorder %s32, 0
      %p85 = por %p83, %p84
      %s86 = ssub.s32 %s26, %s33
      %p87 = scmp.eq.s32.totalorder %s86, 0
      %s89 = sadd.s32 %s88, 1
      %s90 = scalar_select %p87, %s88, %s89
      %p93 = pneg %p87
      %p94 = scmp.eq.s32.totalorder %s26, 1
      %p95 = por %p93, %p94
      %p96 = scmp.ne.s32.totalorder %s88, %s91
      %p97 = scmp.eq.s32.totalorder %s26, 0
      %p98 = por %p96, %p97
      %p99 = scmp.ne.s32.totalorder %s88, %s91
      %p100 = scmp.eq.s32.totalorder %s31, 1
      %p101 = por %p99, %p100
      %p102 = scmp.ne.s32.totalorder %s91, %s92
      %p103 = scmp.eq.s32.totalorder %s31, 0
      %p104 = por %p102, %p103
      %p105 = scmp.ne.s32.totalorder %s91, %s92
      %p106 = scmp.eq.s32.totalorder %s32, 1
      %p107 = por %p105, %p106
      %p109 = scmp.ne.s32.totalorder %s92, %s108
      %p110 = scmp.eq.s32.totalorder %s32, 0
      %p111 = por %p109, %p110
      %s113 = sadd.s32 %s112, 1
      %p116 = scmp.eq.s32.totalorder %s26, 1
      %p117 = scmp.ne.s32.totalorder %s112, %s114
      %p118 = scmp.eq.s32.totalorder %s26, 0
      %p119 = por %p117, %p118
      %p120 = scmp.ne.s32.totalorder %s112, %s114
      %p121 = scmp.eq.s32.totalorder %s31, 1
      %p122 = por %p120, %p121
      %p123 = scmp.ne.s32.totalorder %s114, %s115
      %p124 = scmp.eq.s32.totalorder %s31, 0
      %p125 = por %p123, %p124
      %p126 = scmp.ne.s32.totalorder %s114, %s115
      %p127 = scmp.eq.s32.totalorder %s32, 1
      %p128 = por %p126, %p127
      %p130 = scmp.ne.s32.totalorder %s115, %s129
      %p131 = scmp.eq.s32.totalorder %s32, 0
      %p132 = por %p130, %p131
      %s134 = sadd.s32 %s133, 1
      %p137 = scmp.eq.s32.totalorder %s26, 1
      %p138 = scmp.ne.s32.totalorder %s133, %s135
      %p139 = scmp.eq.s32.totalorder %s26, 0
      %p140 = por %p138, %p139
      %p141 = scmp.ne.s32.totalorder %s133, %s135
      %p142 = scmp.eq.s32.totalorder %s31, 1
      %p143 = por %p141, %p142
      %p144 = scmp.ne.s32.totalorder %s135, %s136
      %p145 = scmp.eq.s32.totalorder %s31, 0
      %p146 = por %p144, %p145
      %p147 = scmp.ne.s32.totalorder %s135, %s136
      %p148 = scmp.eq.s32.totalorder %s32, 1
      %p149 = por %p147, %p148
      %p151 = scmp.ne.s32.totalorder %s136, %s150
      %p152 = scmp.eq.s32.totalorder %s32, 0
      %p153 = por %p151, %p152
      %s155 = sadd.s32 %s154, 1
      %p158 = scmp.eq.s32.totalorder %s26, 1
      %p159 = scmp.ne.s32.totalorder %s154, %s156
      %p160 = scmp.eq.s32.totalorder %s26, 0
      %p161 = por %p159, %p160
      %p162 = scmp.ne.s32.totalorder %s154, %s156
      %p163 = scmp.eq.s32.totalorder %s31, 1
      %p164 = por %p162, %p163
      %p165 = scmp.ne.s32.totalorder %s156, %s157
      %p166 = scmp.eq.s32.totalorder %s31, 0
      %p167 = por %p165, %p166
      %p168 = scmp.ne.s32.totalorder %s156, %s157
      %p169 = scmp.eq.s32.totalorder %s32, 1
      %p170 = por %p168, %p169
      %p172 = scmp.ne.s32.totalorder %s157, %s171
      %p173 = scmp.eq.s32.totalorder %s32, 0
      %p174 = por %p172, %p173
      %s176 = sadd.s32 %s175, 1
      %p179 = scmp.eq.s32.totalorder %s26, 1
      %p180 = scmp.ne.s32.totalorder %s175, %s177
      %p181 = scmp.eq.s32.totalorder %s26, 0
      %p182 = por %p180, %p181
      %p183 = scmp.ne.s32.totalorder %s175, %s177
      %p184 = scmp.eq.s32.totalorder %s31, 1
      %p185 = por %p183, %p184
      %p186 = scmp.ne.s32.totalorder %s177, %s178
      %p187 = scmp.eq.s32.totalorder %s31, 0
      %p188 = por %p186, %p187
      %p189 = scmp.ne.s32.totalorder %s177, %s178
      %p190 = scmp.eq.s32.totalorder %s32, 1
      %p191 = por %p189, %p190
      %p193 = scmp.ne.s32.totalorder %s178, %s192
      %p194 = scmp.eq.s32.totalorder %s32, 0
      %p195 = por %p193, %p194
      %s197 = sadd.s32 %s196, 1
      %p200 = scmp.eq.s32.totalorder %s26, 1
      %p201 = scmp.ne.s32.totalorder %s196, %s198
      %p202 = scmp.eq.s32.totalorder %s26, 0
      %p203 = por %p201, %p202
      %p204 = scmp.ne.s32.totalorder %s196, %s198
      %p205 = scmp.eq.s32.totalorder %s31, 1
      %p206 = por %p204, %p205
      %p207 = scmp.ne.s32.totalorder %s198, %s199
      %p208 = scmp.eq.s32.totalorder %s31, 0
      %p209 = por %p207, %p208
      %p210 = scmp.ne.s32.totalorder %s198, %s199
      %p211 = scmp.eq.s32.totalorder %s32, 1
      %p212 = por %p210, %p211
      %p214 = scmp.ne.s32.totalorder %s199, %s213
      %p215 = scmp.eq.s32.totalorder %s32, 0
      %p216 = por %p214, %p215
      %s218 = sadd.s32 %s217, 1
      %p221 = scmp.eq.s32.totalorder %s26, 1
      %p222 = scmp.ne.s32.totalorder %s217, %s219
      %p223 = scmp.eq.s32.totalorder %s26, 0
      %p224 = por %p222, %p223
      %p225 = scmp.ne.s32.totalorder %s217, %s219
      %p226 = scmp.eq.s32.totalorder %s31, 1
      %p227 = por %p225, %p226
      %p228 = scmp.ne.s32.totalorder %s219, %s220
      %p229 = scmp.eq.s32.totalorder %s31, 0
      %p230 = por %p228, %p229
      %p231 = scmp.ne.s32.totalorder %s219, %s220
      %p232 = scmp.eq.s32.totalorder %s32, 1
      %p233 = por %p231, %p232
      %p235 = scmp.ne.s32.totalorder %s220, %s234
      %p236 = scmp.eq.s32.totalorder %s32, 0
      %p237 = por %p235, %p236
      %s238 = ssub.s32 %s26, %s33
      %p239 = scmp.eq.s32.totalorder %s238, 0
      %s241 = sadd.s32 %s240, 1
      %s242 = scalar_select %p239, %s240, %s241
      %p245 = pneg %p239
      %p246 = scmp.eq.s32.totalorder %s26, 1
      %p247 = por %p245, %p246
      %p248 = scmp.ne.s32.totalorder %s240, %s243
      %p249 = scmp.eq.s32.totalorder %s26, 0
      %p250 = por %p248, %p249
      %p251 = scmp.ne.s32.totalorder %s240, %s243
      %p252 = scmp.eq.s32.totalorder %s31, 1
      %p253 = por %p251, %p252
      %p254 = scmp.ne.s32.totalorder %s243, %s244
      %p255 = scmp.eq.s32.totalorder %s31, 0
      %p256 = por %p254, %p255
      %p257 = scmp.ne.s32.totalorder %s243, %s244
      %p258 = scmp.eq.s32.totalorder %s32, 1
      %p259 = por %p257, %p258
      %p261 = scmp.ne.s32.totalorder %s244, %s260
      %p262 = scmp.eq.s32.totalorder %s32, 0
      %p263 = por %p261, %p262
      %p264 = scmp.le.s32.totalorder 1, %s26
      %p265 = scmp.lt.s32.totalorder %s26, 3
      %p266 = pnand %p264, %p265
      %p267 = pneg %p266
      // Predicated region
      $region9: #{tpu_custom_call.1} parent=5 // pred_check
        _
      $region10: #{tpu_custom_call.1} parent=5 // pred_check_branch
        %269 = sbr.rel (%p266) target = $region12
      $region11: #{tpu_custom_call.1} parent=5 // pred_region
        %s270 = ssub.s32 %s26, 1
        // Predicated region
        $region13: #{tpu_custom_call.1} parent=11 // pred_check
          %p271 = pneg %p125
        $region14: #{tpu_custom_call.1} parent=11 // pred_check_branch
          %273 = sbr.rel (%p271) target = $region16
        $region15: #{tpu_custom_call.1} parent=11 // pred_region
          %s275 = ssub.s32 512, 512
          %276 = vsyncadd [#allocation9], %s275
          %s277 = sshll.u32 [#allocation8], 4
          %s278 = int_to_ptr.vmem [resolvable:$true] %s277
          %283 = dma.hbm_to_vmem [thread:$0]  %s3, 512, %s278, [#allocation9], 128, 128, 8
        $region16: #{tpu_custom_call.1} parent=11 // pred_fallthru
          _
        // Predicated region
        $region17: #{tpu_custom_call.1} parent=11 // pred_check
          %p284 = pneg %p146
        $region18: #{tpu_custom_call.1} parent=11 // pred_check_branch
          %286 = sbr.rel (%p284) target = $region20
        $region19: #{tpu_custom_call.1} parent=11 // pred_region
          _
        $region20: #{tpu_custom_call.1} parent=11 // pred_fallthru
          _
        // Predicated region
        $region21: #{tpu_custom_call.1} parent=11 // pred_check
          %p287 = pneg %p167
        $region22: #{tpu_custom_call.1} parent=11 // pred_check_branch
          %289 = sbr.rel (%p287) target = $region24
        $region23: #{tpu_custom_call.1} parent=11 // pred_region
          %s291 = ssub.s32 512, 512
          %292 = vsyncadd [#allocation9], %s291
          %s293 = sshll.u32 [#allocation10], 4
          %s294 = int_to_ptr.vmem [resolvable:$true] %s293
          %299 = dma.hbm_to_vmem [thread:$0]  %s5, 512, %s294, [#allocation9], 128, 128, 8
        $region24: #{tpu_custom_call.1} parent=11 // pred_fallthru
          _
        // Predicated region
        $region25: #{tpu_custom_call.1} parent=11 // pred_check
          %p300 = pneg %p188
        $region26: #{tpu_custom_call.1} parent=11 // pred_check_branch
          %302 = sbr.rel (%p300) target = $region28
        $region27: #{tpu_custom_call.1} parent=11 // pred_region
          _
        $region28: #{tpu_custom_call.1} parent=11 // pred_fallthru
          _
        // Predicated region
        $region29: #{tpu_custom_call.1} parent=11 // pred_check
          %p303 = pneg %p209
        $region30: #{tpu_custom_call.1} parent=11 // pred_check_branch
          %305 = sbr.rel (%p303) target = $region32
        $region31: #{tpu_custom_call.1} parent=11 // pred_region
          %s307 = ssub.s32 512, 512
          %308 = vsyncadd [#allocation12], %s307
          %s309 = sshll.u32 [#allocation11], 4
          %s310 = int_to_ptr.vmem [resolvable:$true] %s309
          %315 = dma.hbm_to_vmem [thread:$0]  %s7, 512, %s310, [#allocation12], 128, 128, 8
        $region32: #{tpu_custom_call.1} parent=11 // pred_fallthru
          _
        // Predicated region
        $region33: #{tpu_custom_call.1} parent=11 // pred_check
          %p316 = pneg %p230
        $region34: #{tpu_custom_call.1} parent=11 // pred_check_branch
          %318 = sbr.rel (%p316) target = $region36
        $region35: #{tpu_custom_call.1} parent=11 // pred_region
          _
        $region36: #{tpu_custom_call.1} parent=11 // pred_fallthru
          _
      $region12: #{tpu_custom_call.1} parent=5 // pred_fallthru
        _
      %p319 = scmp.lt.s32.totalorder %s26, 2
      // Predicated region
      $region37: #{tpu_custom_call.1} parent=5 // pred_check
        %p320 = pneg %p319
      $region38: #{tpu_custom_call.1} parent=5 // pred_check_branch
        %322 = sbr.rel (%p320) target = $region40
      $region39: #{tpu_custom_call.1} parent=5 // pred_region
        // Predicated region
        $region41: #{tpu_custom_call.1} parent=39 // pred_check
          %p323 = pneg %p46
        $region42: #{tpu_custom_call.1} parent=39 // pred_check_branch
          %325 = sbr.rel (%p323) target = $region44
        $region43: #{tpu_custom_call.1} parent=39 // pred_region
          %s326 = sand.u32 %s36, 1
          %s327 = scalar_lea.sflag [#allocation3], %s326
          %s328 = sand.u32 %s36, 1
          %s329 = smul.addr %s328, 8
          %s330 = scalar_lea.vmem [#allocation2], %s329
          %s332 = ssub.s32 128, 128
          %333 = vsyncadd %s327, %s332
          %s334 = smul.addr %s26, 128
          %s335 = scalar_lea.hbm %s0, %s334
          %s337 = sshll.u32 %s330, 4
          %s338 = int_to_ptr.vmem [resolvable:$true] %s337
          %340 = dma.hbm_to_vmem [thread:$0]  %s335, 128, %s338, %s327
        $region44: #{tpu_custom_call.1} parent=39 // pred_fallthru
          _
        // Predicated region
        $region45: #{tpu_custom_call.1} parent=39 // pred_check
          %p341 = pneg %p72
        $region46: #{tpu_custom_call.1} parent=39 // pred_check_branch
          %343 = sbr.rel (%p341) target = $region48
        $region47: #{tpu_custom_call.1} parent=39 // pred_region
          %s344 = sand.u32 %s26, 1
          %s345 = scalar_lea.sflag [#allocation6], %s344
          %s346 = sand.u32 %s62, 1
          %s347 = smul.addr %s346, 8
          %s348 = scalar_lea.vmem [#allocation5], %s347
          %s350 = ssub.s32 128, 128
          %351 = vsyncadd %s345, %s350
          %s352 = smul.addr %s26, 128
          %s353 = scalar_lea.hbm %s1, %s352
          %s355 = sshll.u32 %s348, 4
          %s356 = int_to_ptr.vmem [resolvable:$true] %s355
          %358 = dma.hbm_to_vmem [thread:$0]  %s353, 128, %s356, %s345
        $region48: #{tpu_custom_call.1} parent=39 // pred_fallthru
          _
        // Predicated region
        $region49: #{tpu_custom_call.1} parent=39 // pred_check
          %p359 = pneg %p98
        $region50: #{tpu_custom_call.1} parent=39 // pred_check_branch
          %361 = sbr.rel (%p359) target = $region52
        $region51: #{tpu_custom_call.1} parent=39 // pred_region
          %s362 = sand.u32 %s26, 1
          %s363 = scalar_lea.sflag [#allocation6], %s362
          %s364 = sand.u32 %s88, 1
          %s365 = smul.addr %s364, 8
          %s366 = scalar_lea.vmem [#allocation7], %s365
          %s368 = ssub.s32 128, 128
          %369 = vsyncadd %s363, %s368
          %s370 = smul.addr %s26, 128
          %s371 = scalar_lea.hbm %s2, %s370
          %s373 = sshll.u32 %s366, 4
          %s374 = int_to_ptr.vmem [resolvable:$true] %s373
          %376 = dma.hbm_to_vmem [thread:$0]  %s371, 128, %s374, %s363
        $region52: #{tpu_custom_call.1} parent=39 // pred_fallthru
          _
      $region40: #{tpu_custom_call.1} parent=5 // pred_fallthru
        _
      %p377 = scmp.le.s32.totalorder 1, %s26
      %p378 = scmp.lt.s32.totalorder %s26, 3
      %p379 = pnand %p377, %p378
      %p380 = pneg %p379
      // Predicated region
      $region53: #{tpu_custom_call.1} parent=5 // pred_check
        _
      $region54: #{tpu_custom_call.1} parent=5 // pred_check_branch
        %382 = sbr.rel (%p379) target = $region56
      $region55: #{tpu_custom_call.1} parent=5 // pred_region
        %s383 = ssub.s32 %s26, 1
        %s384 = sand.u32 %s39, 1
        %s385 = scalar_lea.sflag [#allocation3], %s384
        %s386 = sand.u32 %s39, 1
        %s387 = smul.addr %s386, 8
        %s388 = scalar_lea.vmem [#allocation2], %s387
        // Predicated region
        $region57: #{tpu_custom_call.1} parent=55 // pred_check
          %p389 = pneg %p52
        $region58: #{tpu_custom_call.1} parent=55 // pred_check_branch
          %391 = sbr.rel (%p389) target = $region60
        $region59: #{tpu_custom_call.1} parent=55 // pred_region
          %392 = dma.done %s385, 128
        $region60: #{tpu_custom_call.1} parent=55 // pred_fallthru
          _
        %s393 = sand.u32 %s31, 1
        %s394 = scalar_lea.sflag [#allocation6], %s393
        %s395 = sand.u32 %s65, 1
        %s396 = smul.addr %s395, 8
        %s397 = scalar_lea.vmem [#allocation5], %s396
        // Predicated region
        $region61: #{tpu_custom_call.1} parent=55 // pred_check
          %p398 = pneg %p78
        $region62: #{tpu_custom_call.1} parent=55 // pred_check_branch
          %400 = sbr.rel (%p398) target = $region64
        $region63: #{tpu_custom_call.1} parent=55 // pred_region
          %401 = dma.done %s394, 128
        $region64: #{tpu_custom_call.1} parent=55 // pred_fallthru
          _
        %s402 = sand.u32 %s31, 1
        %s403 = scalar_lea.sflag [#allocation6], %s402
        %s404 = sand.u32 %s91, 1
        %s405 = smul.addr %s404, 8
        %s406 = scalar_lea.vmem [#allocation7], %s405
        // Predicated region
        $region65: #{tpu_custom_call.1} parent=55 // pred_check
          %p407 = pneg %p104
        $region66: #{tpu_custom_call.1} parent=55 // pred_check_branch
          %409 = sbr.rel (%p407) target = $region68
        $region67: #{tpu_custom_call.1} parent=55 // pred_region
          %410 = dma.done %s403, 128
        $region68: #{tpu_custom_call.1} parent=55 // pred_fallthru
          _
        // Predicated region
        $region69: #{tpu_custom_call.1} parent=55 // pred_check
          %p411 = pneg %p125
        $region70: #{tpu_custom_call.1} parent=55 // pred_check_branch
          %413 = sbr.rel (%p411) target = $region72
        $region71: #{tpu_custom_call.1} parent=55 // pred_region
          %414 = dma.done [#allocation9], 512
        $region72: #{tpu_custom_call.1} parent=55 // pred_fallthru
          _
        // Predicated region
        $region73: #{tpu_custom_call.1} parent=55 // pred_check
          %p415 = pneg %p167
        $region74: #{tpu_custom_call.1} parent=55 // pred_check_branch
          %417 = sbr.rel (%p415) target = $region76
        $region75: #{tpu_custom_call.1} parent=55 // pred_region
          %418 = dma.done [#allocation9], 512
        $region76: #{tpu_custom_call.1} parent=55 // pred_fallthru
          _
        // Predicated region
        $region77: #{tpu_custom_call.1} parent=55 // pred_check
          %p419 = pneg %p209
        $region78: #{tpu_custom_call.1} parent=55 // pred_check_branch
          %421 = sbr.rel (%p419) target = $region80
        $region79: #{tpu_custom_call.1} parent=55 // pred_region
          %422 = dma.done [#allocation12], 512
        $region80: #{tpu_custom_call.1} parent=55 // pred_fallthru
          _
        %s423 = sand.u32 %s39, 1
        %s424 = scalar_lea.sflag [#allocation3], %s423
        %s425 = sand.u32 %s39, 1
        %s426 = smul.addr %s425, 8
        %s427 = scalar_lea.vmem [#allocation2], %s426
        %p428 = pneg %p52
        %p429 = pneg %p49
        %s430 = sand.u32 %s31, 1
        %s431 = scalar_lea.sflag [#allocation6], %s430
        %s432 = sand.u32 %s65, 1
        %s433 = smul.addr %s432, 8
        %s434 = scalar_lea.vmem [#allocation5], %s433
        %p435 = pneg %p78
        %p436 = pneg %p75
        %s437 = sand.u32 %s31, 1
        %s438 = scalar_lea.sflag [#allocation6], %s437
        %s439 = sand.u32 %s91, 1
        %s440 = smul.addr %s439, 8
        %s441 = scalar_lea.vmem [#allocation7], %s440
        %p442 = pneg %p104
        %p443 = pneg %p101
        %p444 = pneg %p125
        %p445 = pneg %p122
        %p446 = pneg %p146
        %p447 = pneg %p143
        %p448 = pneg %p167
        %p449 = pneg %p164
        %p450 = pneg %p188
        %p451 = pneg %p185
        %p452 = pneg %p209
        %p453 = pneg %p206
        %p454 = pneg %p230
        %p455 = pneg %p227
        %p456 = pneg %p256
        %p457 = pneg %p253
        %s458 = sand.u32 %s243, 1
        %s459 = scalar_lea.sflag [#allocation4], %s458
        %s460 = sand.u32 %s243, 1
        %s461 = smul.addr %s460, 8
        %s462 = scalar_lea.vmem [#allocation13], %s461
        %v463 = vld [vmem:[%s388] sm:$0xff]
        %v464 = vld [vmem:[#allocation8] sm:$0xff]
        %v465 = vld [vmem:[#allocation8 + $0x8] sm:$0xff]
        %v466 = vld [vmem:[#allocation8 + $0x10] sm:$0xff]
        %v467 = vld [vmem:[#allocation8 + $0x18] sm:$0xff]
        %v468 = vld [vmem:[%s4] sm:$0x1]
        %v470 = vlaneseq
        %v471 = vshrl.u32 %v470, 7
        %v472 = vsub.s32 0, %v471
        %v473 = vrot.slane %v468, %v472
        %vm475 = vcmask 261120
        %v477 = vsel %vm475, %v463, 0
        %479 = vmatprep.subr.mxu0 0.0
        %480 = vmatpush1.msra.mxu0 %v464
        %481 = vmatprep.subr.mxu0 0.0
        %482 = vmatpush1.msra.mxu0 %v465
        %483 = vmatprep.subr.mxu0 0.0
        %484 = vmatpush1.msra.mxu0 %v466
        %485 = vmatprep.subr.mxu0 0.0
        %486 = vmatpush1.msra.mxu0 %v467
        %487 = vmatprep.subr.mxu0 0.0
        %488 = vmatpush1.msra.mxu0 0.0
        %489 = vmatprep.subr.mxu0 0.0
        %490 = vmatpush1.msra.mxu0 0.0
        %491 = vmatprep.subr.mxu0 0.0
        %492 = vmatpush1.msra.mxu0 0.0
        %493 = vmatprep.subr.mxu0 0.0
        %494 = vmatpush1.msra.mxu0 0.0
        %495 = vmatprep.subr.mxu0 0.0
        %496 = vmatpush1.msra.mxu0 0.0
        %497 = vmatprep.subr.mxu0 0.0
        %498 = vmatpush1.msra.mxu0 0.0
        %499 = vmatprep.subr.mxu0 0.0
        %500 = vmatpush1.msra.mxu0 0.0
        %501 = vmatprep.subr.mxu0 0.0
        %502 = vmatpush1.msra.mxu0 0.0
        %503 = vmatprep.subr.mxu0 0.0
        %504 = vmatpush1.msra.mxu0 0.0
        %505 = vmatprep.subr.mxu0 0.0
        %506 = vmatpush1.msra.mxu0 0.0
        %507 = vmatprep.subr.mxu0 0.0
        %508 = vmatpush1.msra.mxu0 0.0
        %509 = vmatprep.subr.mxu0 0.0
        %510 = vmatpush1.msra.mxu0 0.0
        %511 = vmatprep.subr.mxu0 0.0
        %512 = vmatpush1.msra.mxu0 0.0
        %513 = vmatprep.subr.mxu0 0.0
        %514 = vmatpush1.msra.mxu0 0.0
        %515 = vmatprep.subr.mxu0 0.0
        %516 = vmatpush1.msra.mxu0 0.0
        %517 = vmatprep.subr.mxu0 0.0
        %518 = vmatpush1.msra.mxu0 0.0
        %519 = vmatprep.subr.mxu0 0.0
        %520 = vmatpush1.msra.mxu0 0.0
        %521 = vmatprep.subr.mxu0 0.0
        %522 = vmatpush1.msra.mxu0 0.0
        %523 = vmatprep.subr.mxu0 0.0
        %524 = vmatpush1.msra.mxu0 0.0
        %525 = vmatprep.subr.mxu0 0.0
        %526 = vmatpush1.msra.mxu0 0.0
        %527 = vmatprep.subr.mxu0 0.0
        %528 = vmatpush1.msra.mxu0 0.0
        %529 = vmatprep.subr.mxu0 0.0
        %530 = vmatpush1.msra.mxu0 0.0
        %531 = vmatprep.subr.mxu0 0.0
        %532 = vmatpush1.msra.mxu0 0.0
        %533 = vmatprep.subr.mxu0 0.0
        %534 = vmatpush1.msra.mxu0 0.0
        %535 = vmatprep.subr.mxu0 0.0
        %536 = vmatpush1.msra.mxu0 0.0
        %537 = vmatprep.subr.mxu0 0.0
        %538 = vmatpush1.msra.mxu0 0.0
        %539 = vmatprep.subr.mxu0 0.0
        %540 = vmatpush1.msra.mxu0 0.0
        %541 = vmatprep.subr.mxu0 0.0
        %542 = vmatpush1.msra.mxu0 0.0
        %543 = vmatprep.mubr.f32.mxu0 0.0
        %544 = vmatmul.mubr.f32.gmra.mrb[0].mxu0 %v477
        %v545 = vpop.f32.mrb[0].mxu0
        %v546 = vadd.f32 %v473, %v545
        %v547 = vpop.f32.mrb[0].mxu0
        %548 = vdwg.mxu0
        %v549 = vld [vmem:[%s397] sm:$0xff]
        %v550 = vld [vmem:[#allocation10] sm:$0xff]
        %v551 = vld [vmem:[#allocation10 + $0x8] sm:$0xff]
        %v552 = vld [vmem:[#allocation10 + $0x10] sm:$0xff]
        %v553 = vld [vmem:[#allocation10 + $0x18] sm:$0xff]
        %v554 = vld [vmem:[%s6] sm:$0x1]
        %v556 = vlaneseq
        %v557 = vshrl.u32 %v556, 7
        %v558 = vsub.s32 0, %v557
        %v559 = vrot.slane %v554, %v558
        %v562 = vsel %vm475, %v549, 0
        %564 = vmatprep.subr.mxu0 0.0
        %565 = vmatpush1.msra.mxu0 %v550
        %566 = vmatprep.subr.mxu0 0.0
        %567 = vmatpush1.msra.mxu0 %v551
        %568 = vmatprep.subr.mxu0 0.0
        %569 = vmatpush1.msra.mxu0 %v552
        %570 = vmatprep.subr.mxu0 0.0
        %571 = vmatpush1.msra.mxu0 %v553
        %572 = vmatprep.subr.mxu0 0.0
        %573 = vmatpush1.msra.mxu0 0.0
        %574 = vmatprep.subr.mxu0 0.0
        %575 = vmatpush1.msra.mxu0 0.0
        %576 = vmatprep.subr.mxu0 0.0
        %577 = vmatpush1.msra.mxu0 0.0
        %578 = vmatprep.subr.mxu0 0.0
        %579 = vmatpush1.msra.mxu0 0.0
        %580 = vmatprep.subr.mxu0 0.0
        %581 = vmatpush1.msra.mxu0 0.0
        %582 = vmatprep.subr.mxu0 0.0
        %583 = vmatpush1.msra.mxu0 0.0
        %584 = vmatprep.subr.mxu0 0.0
        %585 = vmatpush1.msra.mxu0 0.0
        %586 = vmatprep.subr.mxu0 0.0
        %587 = vmatpush1.msra.mxu0 0.0
        %588 = vmatprep.subr.mxu0 0.0
        %589 = vmatpush1.msra.mxu0 0.0
        %590 = vmatprep.subr.mxu0 0.0
        %591 = vmatpush1.msra.mxu0 0.0
        %592 = vmatprep.subr.mxu0 0.0
        %593 = vmatpush1.msra.mxu0 0.0
        %594 = vmatprep.subr.mxu0 0.0
        %595 = vmatpush1.msra.mxu0 0.0
        %596 = vmatprep.subr.mxu0 0.0
        %597 = vmatpush1.msra.mxu0 0.0
        %598 = vmatprep.subr.mxu0 0.0
        %599 = vmatpush1.msra.mxu0 0.0
        %600 = vmatprep.subr.mxu0 0.0
        %601 = vmatpush1.msra.mxu0 0.0
        %602 = vmatprep.subr.mxu0 0.0
        %603 = vmatpush1.msra.mxu0 0.0
        %604 = vmatprep.subr.mxu0 0.0
        %605 = vmatpush1.msra.mxu0 0.0
        %606 = vmatprep.subr.mxu0 0.0
        %607 = vmatpush1.msra.mxu0 0.0
        %608 = vmatprep.subr.mxu0 0.0
        %609 = vmatpush1.msra.mxu0 0.0
        %610 = vmatprep.subr.mxu0 0.0
        %611 = vmatpush1.msra.mxu0 0.0
        %612 = vmatprep.subr.mxu0 0.0
        %613 = vmatpush1.msra.mxu0 0.0
        %614 = vmatprep.subr.mxu0 0.0
        %615 = vmatpush1.msra.mxu0 0.0
        %616 = vmatprep.subr.mxu0 0.0
        %617 = vmatpush1.msra.mxu0 0.0
        %618 = vmatprep.subr.mxu0 0.0
        %619 = vmatpush1.msra.mxu0 0.0
        %620 = vmatprep.subr.mxu0 0.0
        %621 = vmatpush1.msra.mxu0 0.0
        %622 = vmatprep.subr.mxu0 0.0
        %623 = vmatpush1.msra.mxu0 0.0
        %624 = vmatprep.subr.mxu0 0.0
        %625 = vmatpush1.msra.mxu0 0.0
        %626 = vmatprep.subr.mxu0 0.0
        %627 = vmatpush1.msra.mxu0 0.0
        %628 = vmatprep.mubr.f32.mxu0 0.0
        %629 = vmatmul.mubr.f32.gmra.mrb[0].mxu0 %v562
        %v630 = vpop.f32.mrb[0].mxu0
        %v631 = vadd.f32 %v559, %v630
        %v632 = vpop.f32.mrb[0].mxu0
        %633 = vdwg.mxu0
        %v634 = vld [vmem:[%s406] sm:$0xff]
        %v635 = vld [vmem:[#allocation11] sm:$0xff]
        %v636 = vld [vmem:[#allocation11 + $0x8] sm:$0xff]
        %v637 = vld [vmem:[#allocation11 + $0x10] sm:$0xff]
        %v638 = vld [vmem:[#allocation11 + $0x18] sm:$0xff]
        %v639 = vld [vmem:[%s8] sm:$0x1]
        %v641 = vlaneseq
        %v642 = vshrl.u32 %v641, 7
        %v643 = vsub.s32 0, %v642
        %v644 = vrot.slane %v639, %v643
        %v647 = vsel %vm475, %v634, 0
        %649 = vmatprep.subr.mxu0 0.0
        %650 = vmatpush1.msra.mxu0 %v635
        %651 = vmatprep.subr.mxu0 0.0
        %652 = vmatpush1.msra.mxu0 %v636
        %653 = vmatprep.subr.mxu0 0.0
        %654 = vmatpush1.msra.mxu0 %v637
        %655 = vmatprep.subr.mxu0 0.0
        %656 = vmatpush1.msra.mxu0 %v638
        %657 = vmatprep.subr.mxu0 0.0
        %658 = vmatpush1.msra.mxu0 0.0
        %659 = vmatprep.subr.mxu0 0.0
        %660 = vmatpush1.msra.mxu0 0.0
        %661 = vmatprep.subr.mxu0 0.0
        %662 = vmatpush1.msra.mxu0 0.0
        %663 = vmatprep.subr.mxu0 0.0
        %664 = vmatpush1.msra.mxu0 0.0
        %665 = vmatprep.subr.mxu0 0.0
        %666 = vmatpush1.msra.mxu0 0.0
        %667 = vmatprep.subr.mxu0 0.0
        %668 = vmatpush1.msra.mxu0 0.0
        %669 = vmatprep.subr.mxu0 0.0
        %670 = vmatpush1.msra.mxu0 0.0
        %671 = vmatprep.subr.mxu0 0.0
        %672 = vmatpush1.msra.mxu0 0.0
        %673 = vmatprep.subr.mxu0 0.0
        %674 = vmatpush1.msra.mxu0 0.0
        %675 = vmatprep.subr.mxu0 0.0
        %676 = vmatpush1.msra.mxu0 0.0
        %677 = vmatprep.subr.mxu0 0.0
        %678 = vmatpush1.msra.mxu0 0.0
        %679 = vmatprep.subr.mxu0 0.0
        %680 = vmatpush1.msra.mxu0 0.0
        %681 = vmatprep.subr.mxu0 0.0
        %682 = vmatpush1.msra.mxu0 0.0
        %683 = vmatprep.subr.mxu0 0.0
        %684 = vmatpush1.msra.mxu0 0.0
        %685 = vmatprep.subr.mxu0 0.0
        %686 = vmatpush1.msra.mxu0 0.0
        %687 = vmatprep.subr.mxu0 0.0
        %688 = vmatpush1.msra.mxu0 0.0
        %689 = vmatprep.subr.mxu0 0.0
        %690 = vmatpush1.msra.mxu0 0.0
        %691 = vmatprep.subr.mxu0 0.0
        %692 = vmatpush1.msra.mxu0 0.0
        %693 = vmatprep.subr.mxu0 0.0
        %694 = vmatpush1.msra.mxu0 0.0
        %695 = vmatprep.subr.mxu0 0.0
        %696 = vmatpush1.msra.mxu0 0.0
        %697 = vmatprep.subr.mxu0 0.0
        %698 = vmatpush1.msra.mxu0 0.0
        %699 = vmatprep.subr.mxu0 0.0
        %700 = vmatpush1.msra.mxu0 0.0
        %701 = vmatprep.subr.mxu0 0.0
        %702 = vmatpush1.msra.mxu0 0.0
        %703 = vmatprep.subr.mxu0 0.0
        %704 = vmatpush1.msra.mxu0 0.0
        %705 = vmatprep.subr.mxu0 0.0
        %706 = vmatpush1.msra.mxu0 0.0
        %707 = vmatprep.subr.mxu0 0.0
        %708 = vmatpush1.msra.mxu0 0.0
        %709 = vmatprep.subr.mxu0 0.0
        %710 = vmatpush1.msra.mxu0 0.0
        %711 = vmatprep.subr.mxu0 0.0
        %712 = vmatpush1.msra.mxu0 0.0
        %713 = vmatprep.mubr.f32.mxu0 0.0
        %714 = vmatmul.mubr.f32.gmra.mrb[0].mxu0 %v647
        %v715 = vpop.f32.mrb[0].mxu0
        %v716 = vadd.f32 %v644, %v715
        %v717 = vpop.f32.mrb[0].mxu0
        %718 = vdwg.mxu0
        %vm719 = vcmask 64512
        %v721 = vsel %vm719, %v546, 0
        %v724 = vsel %vm719, %v631, 0
        %726 = vmatprep.subr.mxu0 0.0
        %727 = vmatpush1.xpose.msra.mxu0 %v724
        %728 = vmatprep.subr.mxu0 0.0
        %729 = vmatpush1.xpose.msra.mxu0 0.0
        %730 = vmatprep.subr.mxu0 0.0
        %731 = vmatpush1.xpose.msra.mxu0 0.0
        %732 = vmatprep.subr.mxu0 0.0
        %733 = vmatpush1.xpose.msra.mxu0 0.0
        %734 = vmatprep.subr.mxu0 0.0
        %735 = vmatpush1.xpose.msra.mxu0 0.0
        %736 = vmatprep.subr.mxu0 0.0
        %737 = vmatpush1.xpose.msra.mxu0 0.0
        %738 = vmatprep.subr.mxu0 0.0
        %739 = vmatpush1.xpose.msra.mxu0 0.0
        %740 = vmatprep.subr.mxu0 0.0
        %741 = vmatpush1.xpose.msra.mxu0 0.0
        %742 = vmatprep.subr.mxu0 0.0
        %743 = vmatpush1.xpose.msra.mxu0 0.0
        %744 = vmatprep.subr.mxu0 0.0
        %745 = vmatpush1.xpose.msra.mxu0 0.0
        %746 = vmatprep.subr.mxu0 0.0
        %747 = vmatpush1.xpose.msra.mxu0 0.0
        %748 = vmatprep.subr.mxu0 0.0
        %749 = vmatpush1.xpose.msra.mxu0 0.0
        %750 = vmatprep.subr.mxu0 0.0
        %751 = vmatpush1.xpose.msra.mxu0 0.0
        %752 = vmatprep.subr.mxu0 0.0
        %753 = vmatpush1.xpose.msra.mxu0 0.0
        %754 = vmatprep.subr.mxu0 0.0
        %755 = vmatpush1.xpose.msra.mxu0 0.0
        %756 = vmatprep.subr.mxu0 0.0
        %757 = vmatpush1.xpose.msra.mxu0 0.0
        %758 = vmatprep.subr.mxu0 0.0
        %759 = vmatpush1.xpose.msra.mxu0 0.0
        %760 = vmatprep.subr.mxu0 0.0
        %761 = vmatpush1.xpose.msra.mxu0 0.0
        %762 = vmatprep.subr.mxu0 0.0
        %763 = vmatpush1.xpose.msra.mxu0 0.0
        %764 = vmatprep.subr.mxu0 0.0
        %765 = vmatpush1.xpose.msra.mxu0 0.0
        %766 = vmatprep.subr.mxu0 0.0
        %767 = vmatpush1.xpose.msra.mxu0 0.0
        %768 = vmatprep.subr.mxu0 0.0
        %769 = vmatpush1.xpose.msra.mxu0 0.0
        %770 = vmatprep.subr.mxu0 0.0
        %771 = vmatpush1.xpose.msra.mxu0 0.0
        %772 = vmatprep.subr.mxu0 0.0
        %773 = vmatpush1.xpose.msra.mxu0 0.0
        %774 = vmatprep.subr.mxu0 0.0
        %775 = vmatpush1.xpose.msra.mxu0 0.0
        %776 = vmatprep.subr.mxu0 0.0
        %777 = vmatpush1.xpose.msra.mxu0 0.0
        %778 = vmatprep.subr.mxu0 0.0
        %779 = vmatpush1.xpose.msra.mxu0 0.0
        %780 = vmatprep.subr.mxu0 0.0
        %781 = vmatpush1.xpose.msra.mxu0 0.0
        %782 = vmatprep.subr.mxu0 0.0
        %783 = vmatpush1.xpose.msra.mxu0 0.0
        %784 = vmatprep.subr.mxu0 0.0
        %785 = vmatpush1.xpose.msra.mxu0 0.0
        %786 = vmatprep.subr.mxu0 0.0
        %787 = vmatpush1.xpose.msra.mxu0 0.0
        %788 = vmatprep.subr.mxu0 0.0
        %789 = vmatpush1.xpose.msra.mxu0 0.0
        %790 = vmatprep.mubr.f32.mxu0 0.0
        %791 = vmatmul.mubr.f32.gmra.mrb[0].mxu0 %v721
        %v792 = vpop.f32.mrb[0].mxu0
        %v793 = vadd.f32 0.0, %v792
        %v794 = vpop.f32.mrb[0].mxu0
        %795 = vdwg.mxu0
        %v796 = vmul.f32 %v793, 0.35355338
        %v797 = vsel %vm719, %v796, -inf
        %798 = vmax.xlane.f32.xlu0 %v797
        %v799 = vpop.xlane.xlu0 %798
        %v800 = vsub.f32 %v796, %v799
        %v801 = vmul.f32 %v800, 1.442695
        %v802 = vpow.pop %v801
        %v803 = vsel %vm719, %v802, 0.0
        %804 = vadd.xlane.f32.xlu0 %v803
        %v805 = vpop.xlane.xlu0 %804
        %v806 = vrcp.pop %v805
        %v807 = vmul.f32 %v802, %v806
        %v809 = vsel %vm719, %v807, 0
        %811 = vmatprep.subr.mxu0 0.0
        %812 = vmatpush1.msra.mxu0 %v716
        %813 = vmatprep.subr.mxu0 0.0
        %814 = vmatpush1.msra.mxu0 0.0
        %815 = vmatprep.subr.mxu0 0.0
        %816 = vmatpush1.msra.mxu0 0.0
        %817 = vmatprep.subr.mxu0 0.0
        %818 = vmatpush1.msra.mxu0 0.0
        %819 = vmatprep.subr.mxu0 0.0
        %820 = vmatpush1.msra.mxu0 0.0
        %821 = vmatprep.subr.mxu0 0.0
        %822 = vmatpush1.msra.mxu0 0.0
        %823 = vmatprep.subr.mxu0 0.0
        %824 = vmatpush1.msra.mxu0 0.0
        %825 = vmatprep.subr.mxu0 0.0
        %826 = vmatpush1.msra.mxu0 0.0
        %827 = vmatprep.subr.mxu0 0.0
        %828 = vmatpush1.msra.mxu0 0.0
        %829 = vmatprep.subr.mxu0 0.0
        %830 = vmatpush1.msra.mxu0 0.0
        %831 = vmatprep.subr.mxu0 0.0
        %832 = vmatpush1.msra.mxu0 0.0
        %833 = vmatprep.subr.mxu0 0.0
        %834 = vmatpush1.msra.mxu0 0.0
        %835 = vmatprep.subr.mxu0 0.0
        %836 = vmatpush1.msra.mxu0 0.0
        %837 = vmatprep.subr.mxu0 0.0
        %838 = vmatpush1.msra.mxu0 0.0
        %839 = vmatprep.subr.mxu0 0.0
        %840 = vmatpush1.msra.mxu0 0.0
        %841 = vmatprep.subr.mxu0 0.0
        %842 = vmatpush1.msra.mxu0 0.0
        %843 = vmatprep.subr.mxu0 0.0
        %844 = vmatpush1.msra.mxu0 0.0
        %845 = vmatprep.subr.mxu0 0.0
        %846 = vmatpush1.msra.mxu0 0.0
        %847 = vmatprep.subr.mxu0 0.0
        %848 = vmatpush1.msra.mxu0 0.0
        %849 = vmatprep.subr.mxu0 0.0
        %850 = vmatpush1.msra.mxu0 0.0
        %851 = vmatprep.subr.mxu0 0.0
        %852 = vmatpush1.msra.mxu0 0.0
        %853 = vmatprep.subr.mxu0 0.0
        %854 = vmatpush1.msra.mxu0 0.0
        %855 = vmatprep.subr.mxu0 0.0
        %856 = vmatpush1.msra.mxu0 0.0
        %857 = vmatprep.subr.mxu0 0.0
        %858 = vmatpush1.msra.mxu0 0.0
        %859 = vmatprep.subr.mxu0 0.0
        %860 = vmatpush1.msra.mxu0 0.0
        %861 = vmatprep.subr.mxu0 0.0
        %862 = vmatpush1.msra.mxu0 0.0
        %863 = vmatprep.subr.mxu0 0.0
        %864 = vmatpush1.msra.mxu0 0.0
        %865 = vmatprep.subr.mxu0 0.0
        %866 = vmatpush1.msra.mxu0 0.0
        %867 = vmatprep.subr.mxu0 0.0
        %868 = vmatpush1.msra.mxu0 0.0
        %869 = vmatprep.subr.mxu0 0.0
        %870 = vmatpush1.msra.mxu0 0.0
        %871 = vmatprep.subr.mxu0 0.0
        %872 = vmatpush1.msra.mxu0 0.0
        %873 = vmatprep.subr.mxu0 0.0
        %874 = vmatpush1.msra.mxu0 0.0
        %875 = vmatprep.mubr.f32.mxu0 0.0
        %876 = vmatmul.mubr.f32.gmra.mrb[0].mxu0 %v809
        %v877 = vpop.f32.mrb[0].mxu0
        %v878 = vadd.f32 0.0, %v877
        %v879 = vpop.f32.mrb[0].mxu0
        %880 = vdwg.mxu0
        %881 = vrot.lane.b32.xlu0 %v546, 120
        %v882 = vpop.permute.xlu0 %881
        %883 = vrot.lane.b32.xlu0 %v631, 120
        %v884 = vpop.permute.xlu0 %883
        %v885 = vsel %vm719, %v882, 0
        %v887 = vsel %vm719, %v884, 0
        %889 = vmatprep.subr.mxu0 0.0
        %890 = vmatpush1.xpose.msra.mxu0 %v887
        %891 = vmatprep.subr.mxu0 0.0
        %892 = vmatpush1.xpose.msra.mxu0 0.0
        %893 = vmatprep.subr.mxu0 0.0
        %894 = vmatpush1.xpose.msra.mxu0 0.0
        %895 = vmatprep.subr.mxu0 0.0
        %896 = vmatpush1.xpose.msra.mxu0 0.0
        %897 = vmatprep.subr.mxu0 0.0
        %898 = vmatpush1.xpose.msra.mxu0 0.0
        %899 = vmatprep.subr.mxu0 0.0
        %900 = vmatpush1.xpose.msra.mxu0 0.0
        %901 = vmatprep.subr.mxu0 0.0
        %902 = vmatpush1.xpose.msra.mxu0 0.0
        %903 = vmatprep.subr.mxu0 0.0
        %904 = vmatpush1.xpose.msra.mxu0 0.0
        %905 = vmatprep.subr.mxu0 0.0
        %906 = vmatpush1.xpose.msra.mxu0 0.0
        %907 = vmatprep.subr.mxu0 0.0
        %908 = vmatpush1.xpose.msra.mxu0 0.0
        %909 = vmatprep.subr.mxu0 0.0
        %910 = vmatpush1.xpose.msra.mxu0 0.0
        %911 = vmatprep.subr.mxu0 0.0
        %912 = vmatpush1.xpose.msra.mxu0 0.0
        %913 = vmatprep.subr.mxu0 0.0
        %914 = vmatpush1.xpose.msra.mxu0 0.0
        %915 = vmatprep.subr.mxu0 0.0
        %916 = vmatpush1.xpose.msra.mxu0 0.0
        %917 = vmatprep.subr.mxu0 0.0
        %918 = vmatpush1.xpose.msra.mxu0 0.0
        %919 = vmatprep.subr.mxu0 0.0
        %920 = vmatpush1.xpose.msra.mxu0 0.0
        %921 = vmatprep.subr.mxu0 0.0
        %922 = vmatpush1.xpose.msra.mxu0 0.0
        %923 = vmatprep.subr.mxu0 0.0
        %924 = vmatpush1.xpose.msra.mxu0 0.0
        %925 = vmatprep.subr.mxu0 0.0
        %926 = vmatpush1.xpose.msra.mxu0 0.0
        %927 = vmatprep.subr.mxu0 0.0
        %928 = vmatpush1.xpose.msra.mxu0 0.0
        %929 = vmatprep.subr.mxu0 0.0
        %930 = vmatpush1.xpose.msra.mxu0 0.0
        %931 = vmatprep.subr.mxu0 0.0
        %932 = vmatpush1.xpose.msra.mxu0 0.0
        %933 = vmatprep.subr.mxu0 0.0
        %934 = vmatpush1.xpose.msra.mxu0 0.0
        %935 = vmatprep.subr.mxu0 0.0
        %936 = vmatpush1.xpose.msra.mxu0 0.0
        %937 = vmatprep.subr.mxu0 0.0
        %938 = vmatpush1.xpose.msra.mxu0 0.0
        %939 = vmatprep.subr.mxu0 0.0
        %940 = vmatpush1.xpose.msra.mxu0 0.0
        %941 = vmatprep.subr.mxu0 0.0
        %942 = vmatpush1.xpose.msra.mxu0 0.0
        %943 = vmatprep.subr.mxu0 0.0
        %944 = vmatpush1.xpose.msra.mxu0 0.0
        %945 = vmatprep.subr.mxu0 0.0
        %946 = vmatpush1.xpose.msra.mxu0 0.0
        %947 = vmatprep.subr.mxu0 0.0
        %948 = vmatpush1.xpose.msra.mxu0 0.0
        %949 = vmatprep.subr.mxu0 0.0
        %950 = vmatpush1.xpose.msra.mxu0 0.0
        %951 = vmatprep.subr.mxu0 0.0
        %952 = vmatpush1.xpose.msra.mxu0 0.0
        %953 = vmatprep.mubr.f32.mxu0 0.0
        %954 = vmatmul.mubr.f32.gmra.mrb[0].mxu0 %v885
        %v955 = vpop.f32.mrb[0].mxu0
        %v956 = vadd.f32 0.0, %v955
        %v957 = vpop.f32.mrb[0].mxu0
        %958 = vdwg.mxu0
        %v959 = vmul.f32 %v956, 0.35355338
        %v960 = vsel %vm719, %v959, -inf
        %961 = vmax.xlane.f32.xlu0 %v960
        %v962 = vpop.xlane.xlu0 %961
        %v963 = vsub.f32 %v959, %v962
        %v964 = vmul.f32 %v963, 1.442695
        %v965 = vpow.pop %v964
        %v966 = vsel %vm719, %v965, 0.0
        %967 = vadd.xlane.f32.xlu0 %v966
        %v968 = vpop.xlane.xlu0 %967
        %v969 = vrcp.pop %v968
        %v970 = vmul.f32 %v965, %v969
        %972 = vrot.lane.b32.xlu0 %v716, 120
        %v973 = vpop.permute.xlu0 %972
        %v976 = vsel %vm719, %v970, 0
        %978 = vmatprep.subr.mxu0 0.0
        %979 = vmatpush1.msra.mxu0 %v973
        %980 = vmatprep.subr.mxu0 0.0
        %981 = vmatpush1.msra.mxu0 0.0
        %982 = vmatprep.subr.mxu0 0.0
        %983 = vmatpush1.msra.mxu0 0.0
        %984 = vmatprep.subr.mxu0 0.0
        %985 = vmatpush1.msra.mxu0 0.0
        %986 = vmatprep.subr.mxu0 0.0
        %987 = vmatpush1.msra.mxu0 0.0
        %988 = vmatprep.subr.mxu0 0.0
        %989 = vmatpush1.msra.mxu0 0.0
        %990 = vmatprep.subr.mxu0 0.0
        %991 = vmatpush1.msra.mxu0 0.0
        %992 = vmatprep.subr.mxu0 0.0
        %993 = vmatpush1.msra.mxu0 0.0
        %994 = vmatprep.subr.mxu0 0.0
        %995 = vmatpush1.msra.mxu0 0.0
        %996 = vmatprep.subr.mxu0 0.0
        %997 = vmatpush1.msra.mxu0 0.0
        %998 = vmatprep.subr.mxu0 0.0
        %999 = vmatpush1.msra.mxu0 0.0
        %1000 = vmatprep.subr.mxu0 0.0
        %1001 = vmatpush1.msra.mxu0 0.0
        %1002 = vmatprep.subr.mxu0 0.0
        %1003 = vmatpush1.msra.mxu0 0.0
        %1004 = vmatprep.subr.mxu0 0.0
        %1005 = vmatpush1.msra.mxu0 0.0
        %1006 = vmatprep.subr.mxu0 0.0
        %1007 = vmatpush1.msra.mxu0 0.0
        %1008 = vmatprep.subr.mxu0 0.0
        %1009 = vmatpush1.msra.mxu0 0.0
        %1010 = vmatprep.subr.mxu0 0.0
        %1011 = vmatpush1.msra.mxu0 0.0
        %1012 = vmatprep.subr.mxu0 0.0
        %1013 = vmatpush1.msra.mxu0 0.0
        %1014 = vmatprep.subr.mxu0 0.0
        %1015 = vmatpush1.msra.mxu0 0.0
        %1016 = vmatprep.subr.mxu0 0.0
        %1017 = vmatpush1.msra.mxu0 0.0
        %1018 = vmatprep.subr.mxu0 0.0
        %1019 = vmatpush1.msra.mxu0 0.0
        %1020 = vmatprep.subr.mxu0 0.0
        %1021 = vmatpush1.msra.mxu0 0.0
        %1022 = vmatprep.subr.mxu0 0.0
        %1023 = vmatpush1.msra.mxu0 0.0
        %1024 = vmatprep.subr.mxu0 0.0
        %1025 = vmatpush1.msra.mxu0 0.0
        %1026 = vmatprep.subr.mxu0 0.0
        %1027 = vmatpush1.msra.mxu0 0.0
        %1028 = vmatprep.subr.mxu0 0.0
        %1029 = vmatpush1.msra.mxu0 0.0
        %1030 = vmatprep.subr.mxu0 0.0
        %1031 = vmatpush1.msra.mxu0 0.0
        %1032 = vmatprep.subr.mxu0 0.0
        %1033 = vmatpush1.msra.mxu0 0.0
        %1034 = vmatprep.subr.mxu0 0.0
        %1035 = vmatpush1.msra.mxu0 0.0
        %1036 = vmatprep.subr.mxu0 0.0
        %1037 = vmatpush1.msra.mxu0 0.0
        %1038 = vmatprep.subr.mxu0 0.0
        %1039 = vmatpush1.msra.mxu0 0.0
        %1040 = vmatprep.subr.mxu0 0.0
        %1041 = vmatpush1.msra.mxu0 0.0
        %1042 = vmatprep.mubr.f32.mxu0 0.0
        %1043 = vmatmul.mubr.f32.gmra.mrb[0].mxu0 %v976
        %v1044 = vpop.f32.mrb[0].mxu0
        %v1045 = vadd.f32 0.0, %v1044
        %v1046 = vpop.f32.mrb[0].mxu0
        %1047 = vdwg.mxu0
        %1048 = vrot.lane.b32.xlu0 %v546, 112
        %v1049 = vpop.permute.xlu0 %1048
        %1050 = vrot.lane.b32.xlu0 %v631, 112
        %v1051 = vpop.permute.xlu0 %1050
        %v1052 = vsel %vm719, %v1049, 0
        %v1054 = vsel %vm719, %v1051, 0
        %1056 = vmatprep.subr.mxu0 0.0
        %1057 = vmatpush1.xpose.msra.mxu0 %v1054
        %1058 = vmatprep.subr.mxu0 0.0
        %1059 = vmatpush1.xpose.msra.mxu0 0.0
        %1060 = vmatprep.subr.mxu0 0.0
        %1061 = vmatpush1.xpose.msra.mxu0 0.0
        %1062 = vmatprep.subr.mxu0 0.0
        %1063 = vmatpush1.xpose.msra.mxu0 0.0
        %1064 = vmatprep.subr.mxu0 0.0
        %1065 = vmatpush1.xpose.msra.mxu0 0.0
        %1066 = vmatprep.subr.mxu0 0.0
        %1067 = vmatpush1.xpose.msra.mxu0 0.0
        %1068 = vmatprep.subr.mxu0 0.0
        %1069 = vmatpush1.xpose.msra.mxu0 0.0
        %1070 = vmatprep.subr.mxu0 0.0
        %1071 = vmatpush1.xpose.msra.mxu0 0.0
        %1072 = vmatprep.subr.mxu0 0.0
        %1073 = vmatpush1.xpose.msra.mxu0 0.0
        %1074 = vmatprep.subr.mxu0 0.0
        %1075 = vmatpush1.xpose.msra.mxu0 0.0
        %1076 = vmatprep.subr.mxu0 0.0
        %1077 = vmatpush1.xpose.msra.mxu0 0.0
        %1078 = vmatprep.subr.mxu0 0.0
        %1079 = vmatpush1.xpose.msra.mxu0 0.0
        %1080 = vmatprep.subr.mxu0 0.0
        %1081 = vmatpush1.xpose.msra.mxu0 0.0
        %1082 = vmatprep.subr.mxu0 0.0
        %1083 = vmatpush1.xpose.msra.mxu0 0.0
        %1084 = vmatprep.subr.mxu0 0.0
        %1085 = vmatpush1.xpose.msra.mxu0 0.0
        %1086 = vmatprep.subr.mxu0 0.0
        %1087 = vmatpush1.xpose.msra.mxu0 0.0
        %1088 = vmatprep.subr.mxu0 0.0
        %1089 = vmatpush1.xpose.msra.mxu0 0.0
        %1090 = vmatprep.subr.mxu0 0.0
        %1091 = vmatpush1.xpose.msra.mxu0 0.0
        %1092 = vmatprep.subr.mxu0 0.0
        %1093 = vmatpush1.xpose.msra.mxu0 0.0
        %1094 = vmatprep.subr.mxu0 0.0
        %1095 = vmatpush1.xpose.msra.mxu0 0.0
        %1096 = vmatprep.subr.mxu0 0.0
        %1097 = vmatpush1.xpose.msra.mxu0 0.0
        %1098 = vmatprep.subr.mxu0 0.0
        %1099 = vmatpush1.xpose.msra.mxu0 0.0
        %1100 = vmatprep.subr.mxu0 0.0
        %1101 = vmatpush1.xpose.msra.mxu0 0.0
        %1102 = vmatprep.subr.mxu0 0.0
        %1103 = vmatpush1.xpose.msra.mxu0 0.0
        %1104 = vmatprep.subr.mxu0 0.0
        %1105 = vmatpush1.xpose.msra.mxu0 0.0
        %1106 = vmatprep.subr.mxu0 0.0
        %1107 = vmatpush1.xpose.msra.mxu0 0.0
        %1108 = vmatprep.subr.mxu0 0.0
        %1109 = vmatpush1.xpose.msra.mxu0 0.0
        %1110 = vmatprep.subr.mxu0 0.0
        %1111 = vmatpush1.xpose.msra.mxu0 0.0
        %1112 = vmatprep.subr.mxu0 0.0
        %1113 = vmatpush1.xpose.msra.mxu0 0.0
        %1114 = vmatprep.subr.mxu0 0.0
        %1115 = vmatpush1.xpose.msra.mxu0 0.0
        %1116 = vmatprep.subr.mxu0 0.0
        %1117 = vmatpush1.xpose.msra.mxu0 0.0
        %1118 = vmatprep.subr.mxu0 0.0
        %1119 = vmatpush1.xpose.msra.mxu0 0.0
        %1120 = vmatprep.mubr.f32.mxu0 0.0
        %1121 = vmatmul.mubr.f32.gmra.mrb[0].mxu0 %v1052
        %v1122 = vpop.f32.mrb[0].mxu0
        %v1123 = vadd.f32 0.0, %v1122
        %v1124 = vpop.f32.mrb[0].mxu0
        %1125 = vdwg.mxu0
        %v1126 = vmul.f32 %v1123, 0.35355338
        %v1127 = vsel %vm719, %v1126, -inf
        %1128 = vmax.xlane.f32.xlu0 %v1127
        %v1129 = vpop.xlane.xlu0 %1128
        %v1130 = vsub.f32 %v1126, %v1129
        %v1131 = vmul.f32 %v1130, 1.442695
        %v1132 = vpow.pop %v1131
        %v1133 = vsel %vm719, %v1132, 0.0
        %1134 = vadd.xlane.f32.xlu0 %v1133
        %v1135 = vpop.xlane.xlu0 %1134
        %v1136 = vrcp.pop %v1135
        %v1137 = vmul.f32 %v1132, %v1136
        %1138 = vrot.lane.b32.xlu0 %v716, 112
        %v1139 = vpop.permute.xlu0 %1138
        %v1142 = vsel %vm719, %v1137, 0
        %1144 = vmatprep.subr.mxu0 0.0
        %1145 = vmatpush1.msra.mxu0 %v1139
        %1146 = vmatprep.subr.mxu0 0.0
        %1147 = vmatpush1.msra.mxu0 0.0
        %1148 = vmatprep.subr.mxu0 0.0
        %1149 = vmatpush1.msra.mxu0 0.0
        %1150 = vmatprep.subr.mxu0 0.0
        %1151 = vmatpush1.msra.mxu0 0.0
        %1152 = vmatprep.subr.mxu0 0.0
        %1153 = vmatpush1.msra.mxu0 0.0
        %1154 = vmatprep.subr.mxu0 0.0
        %1155 = vmatpush1.msra.mxu0 0.0
        %1156 = vmatprep.subr.mxu0 0.0
        %1157 = vmatpush1.msra.mxu0 0.0
        %1158 = vmatprep.subr.mxu0 0.0
        %1159 = vmatpush1.msra.mxu0 0.0
        %1160 = vmatprep.subr.mxu0 0.0
        %1161 = vmatpush1.msra.mxu0 0.0
        %1162 = vmatprep.subr.mxu0 0.0
        %1163 = vmatpush1.msra.mxu0 0.0
        %1164 = vmatprep.subr.mxu0 0.0
        %1165 = vmatpush1.msra.mxu0 0.0
        %1166 = vmatprep.subr.mxu0 0.0
        %1167 = vmatpush1.msra.mxu0 0.0
        %1168 = vmatprep.subr.mxu0 0.0
        %1169 = vmatpush1.msra.mxu0 0.0
        %1170 = vmatprep.subr.mxu0 0.0
        %1171 = vmatpush1.msra.mxu0 0.0
        %1172 = vmatprep.subr.mxu0 0.0
        %1173 = vmatpush1.msra.mxu0 0.0
        %1174 = vmatprep.subr.mxu0 0.0
        %1175 = vmatpush1.msra.mxu0 0.0
        %1176 = vmatprep.subr.mxu0 0.0
        %1177 = vmatpush1.msra.mxu0 0.0
        %1178 = vmatprep.subr.mxu0 0.0
        %1179 = vmatpush1.msra.mxu0 0.0
        %1180 = vmatprep.subr.mxu0 0.0
        %1181 = vmatpush1.msra.mxu0 0.0
        %1182 = vmatprep.subr.mxu0 0.0
        %1183 = vmatpush1.msra.mxu0 0.0
        %1184 = vmatprep.subr.mxu0 0.0
        %1185 = vmatpush1.msra.mxu0 0.0
        %1186 = vmatprep.subr.mxu0 0.0
        %1187 = vmatpush1.msra.mxu0 0.0
        %1188 = vmatprep.subr.mxu0 0.0
        %1189 = vmatpush1.msra.mxu0 0.0
        %1190 = vmatprep.subr.mxu0 0.0
        %1191 = vmatpush1.msra.mxu0 0.0
        %1192 = vmatprep.subr.mxu0 0.0
        %1193 = vmatpush1.msra.mxu0 0.0
        %1194 = vmatprep.subr.mxu0 0.0
        %1195 = vmatpush1.msra.mxu0 0.0
        %1196 = vmatprep.subr.mxu0 0.0
        %1197 = vmatpush1.msra.mxu0 0.0
        %1198 = vmatprep.subr.mxu0 0.0
        %1199 = vmatpush1.msra.mxu0 0.0
        %1200 = vmatprep.subr.mxu0 0.0
        %1201 = vmatpush1.msra.mxu0 0.0
        %1202 = vmatprep.subr.mxu0 0.0
        %1203 = vmatpush1.msra.mxu0 0.0
        %1204 = vmatprep.subr.mxu0 0.0
        %1205 = vmatpush1.msra.mxu0 0.0
        %1206 = vmatprep.subr.mxu0 0.0
        %1207 = vmatpush1.msra.mxu0 0.0
        %1208 = vmatprep.mubr.f32.mxu0 0.0
        %1209 = vmatmul.mubr.f32.gmra.mrb[0].mxu0 %v1142
        %v1210 = vpop.f32.mrb[0].mxu0
        %v1211 = vadd.f32 0.0, %v1210
        %v1212 = vpop.f32.mrb[0].mxu0
        %1213 = vdwg.mxu0
        %1214 = vrot.lane.b32.xlu0 %v546, 104
        %v1215 = vpop.permute.xlu0 %1214
        %1216 = vrot.lane.b32.xlu0 %v631, 104
        %v1217 = vpop.permute.xlu0 %1216
        %v1218 = vsel %vm719, %v1215, 0
        %v1220 = vsel %vm719, %v1217, 0
        %1222 = vmatprep.subr.mxu0 0.0
        %1223 = vmatpush1.xpose.msra.mxu0 %v1220
        %1224 = vmatprep.subr.mxu0 0.0
        %1225 = vmatpush1.xpose.msra.mxu0 0.0
        %1226 = vmatprep.subr.mxu0 0.0
        %1227 = vmatpush1.xpose.msra.mxu0 0.0
        %1228 = vmatprep.subr.mxu0 0.0
        %1229 = vmatpush1.xpose.msra.mxu0 0.0
        %1230 = vmatprep.subr.mxu0 0.0
        %1231 = vmatpush1.xpose.msra.mxu0 0.0
        %1232 = vmatprep.subr.mxu0 0.0
        %1233 = vmatpush1.xpose.msra.mxu0 0.0
        %1234 = vmatprep.subr.mxu0 0.0
        %1235 = vmatpush1.xpose.msra.mxu0 0.0
        %1236 = vmatprep.subr.mxu0 0.0
        %1237 = vmatpush1.xpose.msra.mxu0 0.0
        %1238 = vmatprep.subr.mxu0 0.0
        %1239 = vmatpush1.xpose.msra.mxu0 0.0
        %1240 = vmatprep.subr.mxu0 0.0
        %1241 = vmatpush1.xpose.msra.mxu0 0.0
        %1242 = vmatprep.subr.mxu0 0.0
        %1243 = vmatpush1.xpose.msra.mxu0 0.0
        %1244 = vmatprep.subr.mxu0 0.0
        %1245 = vmatpush1.xpose.msra.mxu0 0.0
        %1246 = vmatprep.subr.mxu0 0.0
        %1247 = vmatpush1.xpose.msra.mxu0 0.0
        %1248 = vmatprep.subr.mxu0 0.0
        %1249 = vmatpush1.xpose.msra.mxu0 0.0
        %1250 = vmatprep.subr.mxu0 0.0
        %1251 = vmatpush1.xpose.msra.mxu0 0.0
        %1252 = vmatprep.subr.mxu0 0.0
        %1253 = vmatpush1.xpose.msra.mxu0 0.0
        %1254 = vmatprep.subr.mxu0 0.0
        %1255 = vmatpush1.xpose.msra.mxu0 0.0
        %1256 = vmatprep.subr.mxu0 0.0
        %1257 = vmatpush1.xpose.msra.mxu0 0.0
        %1258 = vmatprep.subr.mxu0 0.0
        %1259 = vmatpush1.xpose.msra.mxu0 0.0
        %1260 = vmatprep.subr.mxu0 0.0
        %1261 = vmatpush1.xpose.msra.mxu0 0.0
        %1262 = vmatprep.subr.mxu0 0.0
        %1263 = vmatpush1.xpose.msra.mxu0 0.0
        %1264 = vmatprep.subr.mxu0 0.0
        %1265 = vmatpush1.xpose.msra.mxu0 0.0
        %1266 = vmatprep.subr.mxu0 0.0
        %1267 = vmatpush1.xpose.msra.mxu0 0.0
        %1268 = vmatprep.subr.mxu0 0.0
        %1269 = vmatpush1.xpose.msra.mxu0 0.0
        %1270 = vmatprep.subr.mxu0 0.0
        %1271 = vmatpush1.xpose.msra.mxu0 0.0
        %1272 = vmatprep.subr.mxu0 0.0
        %1273 = vmatpush1.xpose.msra.mxu0 0.0
        %1274 = vmatprep.subr.mxu0 0.0
        %1275 = vmatpush1.xpose.msra.mxu0 0.0
        %1276 = vmatprep.subr.mxu0 0.0
        %1277 = vmatpush1.xpose.msra.mxu0 0.0
        %1278 = vmatprep.subr.mxu0 0.0
        %1279 = vmatpush1.xpose.msra.mxu0 0.0
        %1280 = vmatprep.subr.mxu0 0.0
        %1281 = vmatpush1.xpose.msra.mxu0 0.0
        %1282 = vmatprep.subr.mxu0 0.0
        %1283 = vmatpush1.xpose.msra.mxu0 0.0
        %1284 = vmatprep.subr.mxu0 0.0
        %1285 = vmatpush1.xpose.msra.mxu0 0.0
        %1286 = vmatprep.mubr.f32.mxu0 0.0
        %1287 = vmatmul.mubr.f32.gmra.mrb[0].mxu0 %v1218
        %v1288 = vpop.f32.mrb[0].mxu0
        %v1289 = vadd.f32 0.0, %v1288
        %v1290 = vpop.f32.mrb[0].mxu0
        %1291 = vdwg.mxu0
        %v1292 = vmul.f32 %v1289, 0.35355338
        %v1293 = vsel %vm719, %v1292, -inf
        %1294 = vmax.xlane.f32.xlu0 %v1293
        %v1295 = vpop.xlane.xlu0 %1294
        %v1296 = vsub.f32 %v1292, %v1295
        %v1297 = vmul.f32 %v1296, 1.442695
        %v1298 = vpow.pop %v1297
        %v1299 = vsel %vm719, %v1298, 0.0
        %1300 = vadd.xlane.f32.xlu0 %v1299
        %v1301 = vpop.xlane.xlu0 %1300
        %v1302 = vrcp.pop %v1301
        %v1303 = vmul.f32 %v1298, %v1302
        %1304 = vrot.lane.b32.xlu0 %v716, 104
        %v1305 = vpop.permute.xlu0 %1304
        %v1308 = vsel %vm719, %v1303, 0
        %1310 = vmatprep.subr.mxu0 0.0
        %1311 = vmatpush1.msra.mxu0 %v1305
        %1312 = vmatprep.subr.mxu0 0.0
        %1313 = vmatpush1.msra.mxu0 0.0
        %1314 = vmatprep.subr.mxu0 0.0
        %1315 = vmatpush1.msra.mxu0 0.0
        %1316 = vmatprep.subr.mxu0 0.0
        %1317 = vmatpush1.msra.mxu0 0.0
        %1318 = vmatprep.subr.mxu0 0.0
        %1319 = vmatpush1.msra.mxu0 0.0
        %1320 = vmatprep.subr.mxu0 0.0
        %1321 = vmatpush1.msra.mxu0 0.0
        %1322 = vmatprep.subr.mxu0 0.0
        %1323 = vmatpush1.msra.mxu0 0.0
        %1324 = vmatprep.subr.mxu0 0.0
        %1325 = vmatpush1.msra.mxu0 0.0
        %1326 = vmatprep.subr.mxu0 0.0
        %1327 = vmatpush1.msra.mxu0 0.0
        %1328 = vmatprep.subr.mxu0 0.0
        %1329 = vmatpush1.msra.mxu0 0.0
        %1330 = vmatprep.subr.mxu0 0.0
        %1331 = vmatpush1.msra.mxu0 0.0
        %1332 = vmatprep.subr.mxu0 0.0
        %1333 = vmatpush1.msra.mxu0 0.0
        %1334 = vmatprep.subr.mxu0 0.0
        %1335 = vmatpush1.msra.mxu0 0.0
        %1336 = vmatprep.subr.mxu0 0.0
        %1337 = vmatpush1.msra.mxu0 0.0
        %1338 = vmatprep.subr.mxu0 0.0
        %1339 = vmatpush1.msra.mxu0 0.0
        %1340 = vmatprep.subr.mxu0 0.0
        %1341 = vmatpush1.msra.mxu0 0.0
        %1342 = vmatprep.subr.mxu0 0.0
        %1343 = vmatpush1.msra.mxu0 0.0
        %1344 = vmatprep.subr.mxu0 0.0
        %1345 = vmatpush1.msra.mxu0 0.0
        %1346 = vmatprep.subr.mxu0 0.0
        %1347 = vmatpush1.msra.mxu0 0.0
        %1348 = vmatprep.subr.mxu0 0.0
        %1349 = vmatpush1.msra.mxu0 0.0
        %1350 = vmatprep.subr.mxu0 0.0
        %1351 = vmatpush1.msra.mxu0 0.0
        %1352 = vmatprep.subr.mxu0 0.0
        %1353 = vmatpush1.msra.mxu0 0.0
        %1354 = vmatprep.subr.mxu0 0.0
        %1355 = vmatpush1.msra.mxu0 0.0
        %1356 = vmatprep.subr.mxu0 0.0
        %1357 = vmatpush1.msra.mxu0 0.0
        %1358 = vmatprep.subr.mxu0 0.0
        %1359 = vmatpush1.msra.mxu0 0.0
        %1360 = vmatprep.subr.mxu0 0.0
        %1361 = vmatpush1.msra.mxu0 0.0
        %1362 = vmatprep.subr.mxu0 0.0
        %1363 = vmatpush1.msra.mxu0 0.0
        %1364 = vmatprep.subr.mxu0 0.0
        %1365 = vmatpush1.msra.mxu0 0.0
        %1366 = vmatprep.subr.mxu0 0.0
        %1367 = vmatpush1.msra.mxu0 0.0
        %1368 = vmatprep.subr.mxu0 0.0
        %1369 = vmatpush1.msra.mxu0 0.0
        %1370 = vmatprep.subr.mxu0 0.0
        %1371 = vmatpush1.msra.mxu0 0.0
        %1372 = vmatprep.subr.mxu0 0.0
        %1373 = vmatpush1.msra.mxu0 0.0
        %1374 = vmatprep.mubr.f32.mxu0 0.0
        %1375 = vmatmul.mubr.f32.gmra.mrb[0].mxu0 %v1308
        %v1376 = vpop.f32.mrb[0].mxu0
        %v1377 = vadd.f32 0.0, %v1376
        %v1378 = vpop.f32.mrb[0].mxu0
        %1379 = vdwg.mxu0
        %1381 = vrot.lane.b32.xlu0 %v1045, 8
        %v1382 = vpop.permute.xlu0 %1381
        %1385 = vrot.lane.b32.xlu0 %v1211, 16
        %v1386 = vpop.permute.xlu0 %1385
        %1389 = vrot.lane.b32.xlu0 %v1377, 24
        %v1390 = vpop.permute.xlu0 %1389
        %v1392 = vsel %vm719, %v878, %v1382
        %vm1393 = vcmask 130048
        %v1394 = vsel %vm1393, %v1392, %v1386
        %vm1395 = vcmask 195584
        %v1396 = vsel %vm1395, %v1394, %v1390
        %1397 = vst.msk [vmem:[%s462] sm:$0xff] %vm475, %v1396
        %s1398 = sand.u32 %s243, 1
        %s1399 = scalar_lea.sflag [#allocation4], %s1398
        %s1400 = sand.u32 %s243, 1
        %s1401 = smul.addr %s1400, 8
        %s1402 = scalar_lea.vmem [#allocation13], %s1401
        // Predicated region
        $region81: #{tpu_custom_call.1} parent=55 // pred_check
          %p1403 = pneg %p253
        $region82: #{tpu_custom_call.1} parent=55 // pred_check_branch
          %1405 = sbr.rel (%p1403) target = $region84
        $region83: #{tpu_custom_call.1} parent=55 // pred_region
          %s1407 = ssub.s32 128, 128
          %1408 = vsyncadd %s1399, %s1407
          %s1409 = smul.addr %s31, 128
          %s1410 = scalar_lea.hbm %s9, %s1409
          %s1412 = sshll.u32 %s1402, 4
          %s1413 = int_to_ptr.vmem [resolvable:$true] %s1412
          %1415 = dma.vmem_to_hbm [thread:$0]  %s1413, 128, %s1410, %s1399
        $region84: #{tpu_custom_call.1} parent=55 // pred_fallthru
          _
      $region56: #{tpu_custom_call.1} parent=5 // pred_fallthru
        _
      %p1416 = scmp.le.s32.totalorder 2, %s26
      // Predicated region
      $region85: #{tpu_custom_call.1} parent=5 // pred_check
        %p1417 = pneg %p1416
      $region86: #{tpu_custom_call.1} parent=5 // pred_check_branch
        %1419 = sbr.rel (%p1417) target = $region88
      $region87: #{tpu_custom_call.1} parent=5 // pred_region
        %s1420 = ssub.s32 %s26, 2
        // Predicated region
        $region89: #{tpu_custom_call.1} parent=87 // pred_check
          %p1421 = pneg %p259
        $region90: #{tpu_custom_call.1} parent=87 // pred_check_branch
          %1423 = sbr.rel (%p1421) target = $region92
        $region91: #{tpu_custom_call.1} parent=87 // pred_region
          %s1424 = sand.u32 %s244, 1
          %s1425 = scalar_lea.sflag [#allocation4], %s1424
          %s1426 = sand.u32 %s244, 1
          %s1427 = smul.addr %s1426, 8
          %s1428 = scalar_lea.vmem [#allocation13], %s1427
          %1429 = dma.done %s1425, 128
        $region92: #{tpu_custom_call.1} parent=87 // pred_fallthru
          _
      $region88: #{tpu_custom_call.1} parent=5 // pred_fallthru
        _
    $region6: #{tpu_custom_call.1} parent=1 // loop_footer
      %s30 = sadd.s32 1, %s26
    $region7: #{tpu_custom_call.1} parent=1 // loop_footer_branch
      %25 = sbr.rel target = $region3
    $region8: #{tpu_custom_call.1} parent=1 // loop_exit
      _
    %1430 = vsyncpa [#allocation3], 1
    %s1431 = scalar_lea.sflag [#allocation3], 1
    %1432 = vsyncpa %s1431, 1
    %1433 = vsyncpa [#allocation6], 1
    %s1434 = scalar_lea.sflag [#allocation6], 1
    %1435 = vsyncpa %s1434, 1
    %1436 = vsyncpa [#allocation9], 1
    %1437 = vsyncpa [#allocation12], 1
    %1438 = vsyncpa [#allocation4], 1
    %s1439 = scalar_lea.sflag [#allocation4], 1
    %1440 = vsyncpa %s1439, 1

</llo_original>
